<compile_context>
chip_gen: v5e
topology: v5e:2x2
jax: 0.10.0
libtpu: 0.0.40
codegen_flags: <defaults>
</compile_context>

<pallas_src>
import jax
import jax.numpy as jnp
from jax import lax
from jax.experimental import pallas as pl
from jax.experimental.pallas import tpu as pltpu

D = 384            # MiniLM sentence-embedding dim (3 x 128 lanes)
H = 2 * D          # adapter hidden dim (768)
LN_EPS = 1e-5      # torch.nn.LayerNorm default

MAX_TILE_ROWS = 1024        # ~3 MiB x+out per grid step at D=384 (85%+ of HBM roofline)
MIN_SPLIT_ROWS = 512        # B >= 2*this  =>  force >= 2 grid steps (v7x megacore)
VMEM_LIMIT_BYTES = 32 * 1024 * 1024   # headroom for the 1024-row tile on every gen


def _round_up(n, m):
    return (n + m - 1) // m * m


def _choose_tile(bn, cap):
    """Batch tile: as large as possible, multiple of 8 (or the full batch when
    B <= 8), capped so big batches still produce >= 2 grid steps (v7x)."""
    if bn <= 8:
        return bn                                  # block == full batch dim (allowed)
    tb = (bn // 8) * 8                             # largest multiple of 8 <= bn
    if bn >= 2 * MIN_SPLIT_ROWS:                   # keep both TensorCores busy on v7x
        tb = min(tb, _round_up(pl.cdiv(bn, 2), 8))
    return min(tb, cap)


def medical_adapter_kernel(x_ref, w1_ref, b1_ref, w2_ref, b2_ref,
                           gamma_ref, beta_ref, o_ref):
    cdt = w1_ref.dtype          # matmul operand dtype (bf16 fast path, or f32)

    # Hoisted single reads / broadcasts of the small resident params (all f32).
    b1 = b1_ref[...]
    b2 = b2_ref[...]
    gamma = gamma_ref[...]
    beta = beta_ref[...]

    # x stays f32 in HBM; narrow to the MXU operand dtype in-kernel (VPU work
    # hidden under DMA/MXU — avoids a separate wrapper-side XLA cast pass).
    x = x_ref[...].astype(cdt)                                        # (TB, D)

    # Linear(D, 2D) + ReLU  (MXU, f32 accumulation). Dropout(0.1) = identity in eval.
    h = jnp.dot(x, w1_ref[...], preferred_element_type=jnp.float32) + b1
    h = jnp.maximum(h, 0.0)

    # Linear(2D, D)  (MXU, f32 accumulation).
    y = jnp.dot(h.astype(cdt), w2_ref[...],
                preferred_element_type=jnp.float32) + b2

    # LayerNorm over the last dim: centered two-pass variance (matches torch),
    # rsqrt lands on the EUP.
    inv_d = 1.0 / y.shape[-1]
    mean = jnp.sum(y, axis=-1, keepdims=True) * inv_d
    c = y - mean
    var = jnp.sum(c * c, axis=-1, keepdims=True) * inv_d
    inv = lax.rsqrt(var + LN_EPS)
    o_ref[...] = (c * inv * gamma + beta).astype(o_ref.dtype)


def medical_adapter(x, w1, b1, w2, b2, gamma, beta, *,
                    matmul_dtype=jnp.bfloat16,
                    out_dtype=jnp.float32,
                    max_tile_rows=MAX_TILE_ROWS):
    """x: (B, D) float32 base embeddings -> (B, D) adapted embeddings."""
    Bn, Dn = x.shape

    tb = _choose_tile(Bn, max_tile_rows)
    grid = (pl.cdiv(Bn, tb),)          # partial last block is masked by Pallas
                                       # (no jnp.pad copy, no out[:B] slice).

    # Weights: one-time cast to the MXU operand dtype (tiny arrays). x itself is
    # narrowed inside the kernel; bias / LayerNorm params stay f32.
    if matmul_dtype is not None and w1.dtype != matmul_dtype:
        w1 = w1.astype(matmul_dtype)
        w2 = w2.astype(matmul_dtype)

    # Resident parameters: whole-array VMEM residency (copied in once, not
    # double-buffered / re-DMA'd per grid step).
    resident = pl.BlockSpec(memory_space=pltpu.MemorySpace.VMEM)

    return pl.pallas_call(
        medical_adapter_kernel,
        out_shape=jax.ShapeDtypeStruct((Bn, Dn), out_dtype),
        grid_spec=pltpu.PrefetchScalarGridSpec(
            num_scalar_prefetch=0,
            grid=grid,
            in_specs=[
                pl.BlockSpec((tb, Dn), lambda i: (i, 0)),   # x : tiled over batch
                resident,                                   # W1
                resident,                                   # b1
                resident,                                   # W2
                resident,                                   # b2
                resident,                                   # gamma
                resident,                                   # beta
            ],
            out_specs=pl.BlockSpec((tb, Dn), lambda i: (i, 0)),
        ),
        compiler_params=pltpu.CompilerParams(
            # Batch axis is embarrassingly parallel: with >= 2 grid steps it
            # shards across both TensorCores on v7x.
            dimension_semantics=("parallel",),
            vmem_limit_bytes=VMEM_LIMIT_BYTES),
    )(x, w1, b1, w2, b2, gamma, beta)


def init_params(key):
    """Deterministic init matching torch.nn.Linear / LayerNorm defaults."""
    k1, k2, k3, k4 = jax.random.split(key, 4)
    bound1 = 1.0 / jnp.sqrt(D)   # fan_in = D   for Linear(D, 2D)
    bound2 = 1.0 / jnp.sqrt(H)   # fan_in = 2D  for Linear(2D, D)
    w1 = jax.random.uniform(k1, (D, H), jnp.float32, -bound1, bound1)
    b1 = jax.random.uniform(k2, (1, H), jnp.float32, -bound1, bound1)
    w2 = jax.random.uniform(k3, (H, D), jnp.float32, -bound2, bound2)
    b2 = jax.random.uniform(k4, (1, D), jnp.float32, -bound2, bound2)
    gamma = jnp.ones((1, D), jnp.float32)
    beta = jnp.zeros((1, D), jnp.float32)
    return w1, b1, w2, b2, gamma, beta


def reference(x, w1, b1, w2, b2, gamma, beta):
    h = jnp.maximum(x @ w1 + b1, 0.0)
    y = h @ w2 + b2
    mean = jnp.mean(y, axis=-1, keepdims=True)
    var = jnp.mean((y - mean) ** 2, axis=-1, keepdims=True)
    return (y - mean) / jnp.sqrt(var + LN_EPS) * gamma + beta


if __name__ == "__main__":
    key = jax.random.PRNGKey(0)
    kx, kp, kl = jax.random.split(key, 3)

    # TODO(synk): SentenceTransformer.encode (tokenizer + pretrained MiniLM
    # transformer) has no Pallas equivalent here; synthetic base embeddings
    # stand in for its output.
    B = 16
    x = jax.random.normal(kx, (B, D), jnp.float32)
    params = init_params(kp)
    ref = reference(x, *params)

    # Default path: bf16 MXU operands (narrowed in-kernel), f32 accumulation,
    # f32 LayerNorm, f32 output. Note: bf16 GEMM operands are a small numeric
    # deviation from the torch f32 reference (fine for embeddings).
    out = jax.block_until_ready(medical_adapter(x, *params))
    assert out.shape == (B, D) and out.dtype == jnp.float32
    assert jnp.allclose(out, ref, atol=1e-1, rtol=1e-1)

    # f32-exact path (tight tolerance check of the kernel math).
    out_f32 = jax.block_until_ready(
        medical_adapter(x, *params, matmul_dtype=jnp.float32))
    assert jnp.allclose(out_f32, ref, atol=2e-4, rtol=2e-4)

    # Ragged batch (13 rows): partial boundary block, no pad / no slice copies.
    x13 = x[:13]
    out13 = jax.block_until_ready(
        medical_adapter(x13, *params, matmul_dtype=jnp.float32))
    assert out13.shape == (13, D)
    assert jnp.allclose(out13, reference(x13, *params), atol=2e-4, rtol=2e-4)

    # Tiny batch (5 rows): block == full batch dim.
    x5 = x[:5]
    out5 = jax.block_until_ready(
        medical_adapter(x5, *params, matmul_dtype=jnp.float32))
    assert out5.shape == (5, D)
    assert jnp.allclose(out5, reference(x5, *params), atol=2e-4, rtol=2e-4)

    # Large batch: 1024-row tiles, 4 grid steps (both v7x TensorCores busy),
    # bf16 output to halve writeback traffic in this HBM-bound regime.
    BL = 4096
    xl = jax.random.normal(kl, (BL, D), jnp.float32)
    outl = jax.block_until_ready(
        medical_adapter(xl, *params, out_dtype=jnp.bfloat16))
    assert outl.shape == (BL, D) and outl.dtype == jnp.bfloat16
    assert jnp.allclose(outl.astype(jnp.float32), reference(xl, *params),
                        atol=1e-1, rtol=1e-1)

    print("KERNEL_OK")
</pallas_src>

<mosaic_0001>
module attributes {stable_mosaic.version = 11 : i64} {
  func.func @medical_adapter_kernel(%arg0: i32, %arg1: memref<16x384xf32, #tpu.memory_space<vmem>>, %arg2: memref<384x768xbf16, #tpu.memory_space<vmem>>, %arg3: memref<1x768xf32, #tpu.memory_space<vmem>>, %arg4: memref<768x384xbf16, #tpu.memory_space<vmem>>, %arg5: memref<1x384xf32, #tpu.memory_space<vmem>>, %arg6: memref<1x384xf32, #tpu.memory_space<vmem>>, %arg7: memref<1x384xf32, #tpu.memory_space<vmem>>, %arg8: memref<16x384xf32, #tpu.memory_space<vmem>>) attributes {dimension_semantics = [#tpu.dimension_semantics<parallel>], iteration_bounds = array<i64: 1>, scalar_prefetch = 0 : i64, scratch_operands = 0 : i64, tpu.core_type = #tpu.core_type<tc>, window_params = [{transform_indices = @transform_0, window_bounds = array<i64: 16, 384>}, {pipeline_mode = #tpu.pipeline_mode<synchronous>, transform_indices = @transform_1, window_bounds = array<i64: 384, 768>}, {pipeline_mode = #tpu.pipeline_mode<synchronous>, transform_indices = @transform_2, window_bounds = array<i64: 1, 768>}, {pipeline_mode = #tpu.pipeline_mode<synchronous>, transform_indices = @transform_3, window_bounds = array<i64: 768, 384>}, {pipeline_mode = #tpu.pipeline_mode<synchronous>, transform_indices = @transform_4, window_bounds = array<i64: 1, 384>}, {pipeline_mode = #tpu.pipeline_mode<synchronous>, transform_indices = @transform_5, window_bounds = array<i64: 1, 384>}, {pipeline_mode = #tpu.pipeline_mode<synchronous>, transform_indices = @transform_6, window_bounds = array<i64: 1, 384>}, {transform_indices = @transform_7, window_bounds = array<i64: 16, 384>}]} {
    %c0 = arith.constant 0 : index
    %c0_0 = arith.constant 0 : index
    %0 = vector.load %arg3[%c0, %c0_0] : memref<1x768xf32, #tpu.memory_space<vmem>>, vector<1x768xf32>
    %c0_1 = arith.constant 0 : index
    %c0_2 = arith.constant 0 : index
    %1 = vector.load %arg5[%c0_1, %c0_2] : memref<1x384xf32, #tpu.memory_space<vmem>>, vector<1x384xf32>
    %c0_3 = arith.constant 0 : index
    %c0_4 = arith.constant 0 : index
    %2 = vector.load %arg6[%c0_3, %c0_4] : memref<1x384xf32, #tpu.memory_space<vmem>>, vector<1x384xf32>
    %c0_5 = arith.constant 0 : index
    %c0_6 = arith.constant 0 : index
    %3 = vector.load %arg7[%c0_5, %c0_6] : memref<1x384xf32, #tpu.memory_space<vmem>>, vector<1x384xf32>
    %c0_7 = arith.constant 0 : index
    %c0_8 = arith.constant 0 : index
    %4 = vector.load %arg1[%c0_7, %c0_8] : memref<16x384xf32, #tpu.memory_space<vmem>>, vector<16x384xf32>
    %5 = arith.truncf %4 : vector<16x384xf32> to vector<16x384xbf16>
    %c0_9 = arith.constant 0 : index
    %c0_10 = arith.constant 0 : index
    %6 = vector.load %arg2[%c0_9, %c0_10] : memref<384x768xbf16, #tpu.memory_space<vmem>>, vector<384x768xbf16>
    %cst = arith.constant dense<0.000000e+00> : vector<16x768xf32>
    %7 = tpu.matmul %5, %6, %cst {dimension_numbers = #tpu.dot_dimension_numbers<[1], [0], [0], [1], [0, 0, 1, 1], [], []>} : vector<16x384xbf16>, vector<384x768xbf16>, vector<16x768xf32> -> vector<16x768xf32>
    %8 = vector.broadcast %0 : vector<1x768xf32> to vector<16x768xf32>
    %9 = arith.addf %7, %8 : vector<16x768xf32>
    %cst_11 = arith.constant 0.000000e+00 : f32
    %10 = vector.broadcast %cst_11 : f32 to vector<16x768xf32>
    %11 = arith.maximumf %9, %10 : vector<16x768xf32>
    %12 = arith.truncf %11 : vector<16x768xf32> to vector<16x768xbf16>
    %c0_12 = arith.constant 0 : index
    %c0_13 = arith.constant 0 : index
    %13 = vector.load %arg4[%c0_12, %c0_13] : memref<768x384xbf16, #tpu.memory_space<vmem>>, vector<768x384xbf16>
    %cst_14 = arith.constant dense<0.000000e+00> : vector<16x384xf32>
    %14 = tpu.matmul %12, %13, %cst_14 {dimension_numbers = #tpu.dot_dimension_numbers<[1], [0], [0], [1], [0, 0, 1, 1], [], []>} : vector<16x768xbf16>, vector<768x384xbf16>, vector<16x384xf32> -> vector<16x384xf32>
    %15 = vector.broadcast %1 : vector<1x384xf32> to vector<16x384xf32>
    %16 = arith.addf %14, %15 : vector<16x384xf32>
    %cst_15 = arith.constant dense<0.000000e+00> : vector<16xf32>
    %17 = vector.multi_reduction <add>, %16, %cst_15 [1] : vector<16x384xf32> to vector<16xf32>
    %18 = vector.shape_cast %17 : vector<16xf32> to vector<16x1xf32>
    %cst_16 = arith.constant 0.00260416674 : f32
    %19 = vector.broadcast %cst_16 : f32 to vector<16x1xf32>
    %20 = arith.mulf %18, %19 : vector<16x1xf32>
    %21 = vector.broadcast %20 : vector<16x1xf32> to vector<16x384xf32>
    %22 = arith.subf %16, %21 : vector<16x384xf32>
    %23 = arith.mulf %22, %22 : vector<16x384xf32>
    %cst_17 = arith.constant dense<0.000000e+00> : vector<16xf32>
    %24 = vector.multi_reduction <add>, %23, %cst_17 [1] : vector<16x384xf32> to vector<16xf32>
    %25 = vector.shape_cast %24 : vector<16xf32> to vector<16x1xf32>
    %cst_18 = arith.constant 0.00260416674 : f32
    %26 = vector.broadcast %cst_18 : f32 to vector<16x1xf32>
    %27 = arith.mulf %25, %26 : vector<16x1xf32>
    %cst_19 = arith.constant 9.99999974E-6 : f32
    %28 = vector.broadcast %cst_19 : f32 to vector<16x1xf32>
    %29 = arith.addf %27, %28 : vector<16x1xf32>
    %30 = math.rsqrt %29 : vector<16x1xf32>
    %31 = vector.broadcast %30 : vector<16x1xf32> to vector<16x384xf32>
    %32 = arith.mulf %22, %31 : vector<16x384xf32>
    %33 = vector.broadcast %2 : vector<1x384xf32> to vector<16x384xf32>
    %34 = arith.mulf %32, %33 : vector<16x384xf32>
    %35 = vector.broadcast %3 : vector<1x384xf32> to vector<16x384xf32>
    %36 = arith.addf %34, %35 : vector<16x384xf32>
    %c0_20 = arith.constant 0 : index
    %c0_21 = arith.constant 0 : index
    %37 = vector.load %arg8[%c0_20, %c0_21] : memref<16x384xf32, #tpu.memory_space<vmem>>, vector<16x384xf32>
    tpu.vector_store %arg8[%c0_20, %c0_21], %36 {strides = array<i32>} : memref<16x384xf32, #tpu.memory_space<vmem>>, vector<16x384xf32>,
    return
  }
  func.func @transform_0(%arg0: i32) -> (i32, i32) {
    %c0_i32 = arith.constant 0 : i32
    %c0_i32_0 = arith.constant 0 : i32
    return %arg0, %c0_i32 : i32, i32
  }
  func.func @transform_1(%arg0: i32) -> (i32, i32) {
    %c0_i32 = arith.constant 0 : i32
    %c0_i32_0 = arith.constant 0 : i32
    %c0_i32_1 = arith.constant 0 : i32
    return %c0_i32, %c0_i32_0 : i32, i32
  }
  func.func @transform_2(%arg0: i32) -> (i32, i32) {
    %c0_i32 = arith.constant 0 : i32
    %c0_i32_0 = arith.constant 0 : i32
    %c0_i32_1 = arith.constant 0 : i32
    return %c0_i32, %c0_i32_0 : i32, i32
  }
  func.func @transform_3(%arg0: i32) -> (i32, i32) {
    %c0_i32 = arith.constant 0 : i32
    %c0_i32_0 = arith.constant 0 : i32
    %c0_i32_1 = arith.constant 0 : i32
    return %c0_i32, %c0_i32_0 : i32, i32
  }
  func.func @transform_4(%arg0: i32) -> (i32, i32) {
    %c0_i32 = arith.constant 0 : i32
    %c0_i32_0 = arith.constant 0 : i32
    %c0_i32_1 = arith.constant 0 : i32
    return %c0_i32, %c0_i32_0 : i32, i32
  }
  func.func @transform_5(%arg0: i32) -> (i32, i32) {
    %c0_i32 = arith.constant 0 : i32
    %c0_i32_0 = arith.constant 0 : i32
    %c0_i32_1 = arith.constant 0 : i32
    return %c0_i32, %c0_i32_0 : i32, i32
  }
  func.func @transform_6(%arg0: i32) -> (i32, i32) {
    %c0_i32 = arith.constant 0 : i32
    %c0_i32_0 = arith.constant 0 : i32
    %c0_i32_1 = arith.constant 0 : i32
    return %c0_i32, %c0_i32_0 : i32, i32
  }
  func.func @transform_7(%arg0: i32) -> (i32, i32) {
    %c0_i32 = arith.constant 0 : i32
    %c0_i32_0 = arith.constant 0 : i32
    return %arg0, %c0_i32 : i32, i32
  }
}

</mosaic_0001>

<llo_original>
// kernel: tpu_custom_call.1
$region0: #{tpu_custom_call.1}
  #allocation0 [shape = 'u32[]', space=smem, size = 0x4, offset = 0x4, fixed_abs, tag = 'smem constant byte address 0x4 - core index']
  #allocation1 [shape = 'u32[72,128]{1,0:T(1,128)}', space=vmem, size = 0x9000, scoped, tag = 'internal scratch']
  %s0 = inlined_call_operand.hbm [shape: f32[16,384], index: 0, kind: input, shape index: {}]
  %s1 = inlined_call_operand.hbm [shape: bf16[384,768], index: 1, kind: input, shape index: {}]
  %s2 = inlined_call_operand.hbm [shape: f32[1,768], index: 2, kind: input, shape index: {}]
  %s3 = inlined_call_operand.hbm [shape: bf16[768,384], index: 3, kind: input, shape index: {}]
  %s4 = inlined_call_operand.vmem [shape: f32[1,384], index: 4, kind: input, shape index: {}]
  %s5 = inlined_call_operand.hbm [shape: f32[1,384], index: 5, kind: input, shape index: {}]
  %s6 = inlined_call_operand.hbm [shape: f32[1,384], index: 6, kind: input, shape index: {}]
  %s7 = inlined_call_operand.hbm [shape: f32[16,384], index: 7, kind: output, shape index: {}]
  %s8 = sld [smem:[#allocation0]]
  $region62: #{tpu_custom_call.1} parent=0
    _
  %s10 = ssub.s32 1, %s8
  %s11 = scalar_select 0, %s10, %s8
  $region1: #{tpu_custom_call.1} parent=0
    #allocation2 [shape = 'u8[24576]{0}', space=vmem, size = 0x6000, scoped, tag = 'input window, operand 0, single buffered']
    #allocation3 [shape = 's32[1]{0}', space=sflag, size = 0x4, scoped, tag = 'scoped memory for tpu_custom_call.1']
    #allocation4 [shape = 's32[1]{0}', space=sflag, size = 0x4, scoped, tag = 'scoped memory for tpu_custom_call.1']
    #allocation5 [shape = 'u8[589824]{0}', space=vmem, size = 0x90000, scoped, tag = 'input window, operand 1, single buffered']
    #allocation6 [shape = 's32[1]{0}', space=sflag, size = 0x4, scoped, tag = 'scoped memory for tpu_custom_call.1']
    #allocation7 [shape = 'u8[3072]{0}', space=vmem, size = 0xc00, scoped, tag = 'input window, operand 2, single buffered']
    #allocation8 [shape = 'u8[589824]{0}', space=vmem, size = 0x90000, scoped, tag = 'input window, operand 3, single buffered']
    #allocation9 [shape = 's32[1]{0}', space=sflag, size = 0x4, scoped, tag = 'scoped memory for tpu_custom_call.1']
    #allocation10 [shape = 'u8[1536]{0}', space=vmem, size = 0x800, scoped, tag = 'input window, operand 5, single buffered']
    #allocation11 [shape = 'u8[1536]{0}', space=vmem, size = 0x800, scoped, tag = 'input window, operand 6, single buffered']
    #allocation12 [shape = 's32[1]{0}', space=sflag, size = 0x4, scoped, tag = 'scoped memory for tpu_custom_call.1']
    #allocation13 [shape = 'u8[24576]{0}', space=vmem, size = 0x6000, scoped, tag = 'output window, operand 0, single buffered']
    %12 = vsyncpa [#allocation3], 0
    %13 = vsyncpa [#allocation6], 0
    %14 = vsyncpa [#allocation9], 0
    %15 = vsyncpa [#allocation12], 0
    %16 = vsyncpa [#allocation4], 0
    // Predicated region
    $region2: #{tpu_custom_call.1} parent=1 // pred_check
      _
    $region3: #{tpu_custom_call.1} parent=1 // pred_check_branch
      %18 = sbr.rel (0) target = $region5
    $region4: #{tpu_custom_call.1} parent=1 // pred_region
      %20 = vsyncadd [#allocation3], 0
      %s21 = sshll.u32 %s0, 4
      %s22 = int_to_ptr.hbm [resolvable:$true] %s21
      %s23 = sshll.u32 [#allocation2], 4
      %s24 = int_to_ptr.vmem [resolvable:$true] %s23
      %29 = dma.hbm_to_vmem [thread:$0]  %s22, 768, %s24, [#allocation3], 384, 384, 24
    $region5: #{tpu_custom_call.1} parent=1 // pred_fallthru
      _
    // Predicated region
    $region6: #{tpu_custom_call.1} parent=1 // pred_check
      _
    $region7: #{tpu_custom_call.1} parent=1 // pred_check_branch
      %31 = sbr.rel (0) target = $region9
    $region8: #{tpu_custom_call.1} parent=1 // pred_region
      %33 = vsyncadd [#allocation6], 0
      %s34 = sshll.u32 %s1, 4
      %s35 = int_to_ptr.hbm [resolvable:$true] %s34
      %s36 = sshll.u32 [#allocation5], 4
      %s37 = int_to_ptr.vmem [resolvable:$true] %s36
      %42 = dma.hbm_to_vmem [thread:$0]  %s35, 18432, %s37, [#allocation6], 384, 384, 24
    $region9: #{tpu_custom_call.1} parent=1 // pred_fallthru
      _
    // Predicated region
    $region10: #{tpu_custom_call.1} parent=1 // pred_check
      _
    $region11: #{tpu_custom_call.1} parent=1 // pred_check_branch
      %44 = sbr.rel (0) target = $region13
    $region12: #{tpu_custom_call.1} parent=1 // pred_region
      %46 = vsyncadd [#allocation6], 0
      %s48 = sshll.u32 %s2, 4
      %s49 = int_to_ptr.hbm [resolvable:$true] %s48
      %s50 = sshll.u32 [#allocation7], 4
      %s51 = int_to_ptr.vmem [resolvable:$true] %s50
      %53 = dma.hbm_to_vmem [thread:$0]  %s49, 96, %s51, [#allocation6]
    $region13: #{tpu_custom_call.1} parent=1 // pred_fallthru
      _
    // Predicated region
    $region14: #{tpu_custom_call.1} parent=1 // pred_check
      _
    $region15: #{tpu_custom_call.1} parent=1 // pred_check_branch
      %55 = sbr.rel (0) target = $region17
    $region16: #{tpu_custom_call.1} parent=1 // pred_region
      %57 = vsyncadd [#allocation9], 0
      %s58 = sshll.u32 %s3, 4
      %s59 = int_to_ptr.hbm [resolvable:$true] %s58
      %s60 = sshll.u32 [#allocation8], 4
      %s61 = int_to_ptr.vmem [resolvable:$true] %s60
      %66 = dma.hbm_to_vmem [thread:$0]  %s59, 18432, %s61, [#allocation9], 192, 192, 12
    $region17: #{tpu_custom_call.1} parent=1 // pred_fallthru
      _
    // Predicated region
    $region18: #{tpu_custom_call.1} parent=1 // pred_check
      _
    $region19: #{tpu_custom_call.1} parent=1 // pred_check_branch
      %68 = sbr.rel (0) target = $region21
    $region20: #{tpu_custom_call.1} parent=1 // pred_region
      _
    $region21: #{tpu_custom_call.1} parent=1 // pred_fallthru
      _
    // Predicated region
    $region22: #{tpu_custom_call.1} parent=1 // pred_check
      _
    $region23: #{tpu_custom_call.1} parent=1 // pred_check_branch
      %70 = sbr.rel (0) target = $region25
    $region24: #{tpu_custom_call.1} parent=1 // pred_region
      %72 = vsyncadd [#allocation9], 0
      %s74 = sshll.u32 %s5, 4
      %s75 = int_to_ptr.hbm [resolvable:$true] %s74
      %s76 = sshll.u32 [#allocation10], 4
      %s77 = int_to_ptr.vmem [resolvable:$true] %s76
      %79 = dma.hbm_to_vmem [thread:$0]  %s75, 48, %s77, [#allocation9]
    $region25: #{tpu_custom_call.1} parent=1 // pred_fallthru
      _
    // Predicated region
    $region26: #{tpu_custom_call.1} parent=1 // pred_check
      _
    $region27: #{tpu_custom_call.1} parent=1 // pred_check_branch
      %81 = sbr.rel (0) target = $region29
    $region28: #{tpu_custom_call.1} parent=1 // pred_region
      %83 = vsyncadd [#allocation12], 0
      %s85 = sshll.u32 %s6, 4
      %s86 = int_to_ptr.hbm [resolvable:$true] %s85
      %s87 = sshll.u32 [#allocation11], 4
      %s88 = int_to_ptr.vmem [resolvable:$true] %s87
      %90 = dma.hbm_to_vmem [thread:$0]  %s86, 48, %s88, [#allocation12]
    $region29: #{tpu_custom_call.1} parent=1 // pred_fallthru
      _
    // Predicated region
    $region30: #{tpu_custom_call.1} parent=1 // pred_check
      _
    $region31: #{tpu_custom_call.1} parent=1 // pred_check_branch
      %92 = sbr.rel (0) target = $region33
    $region32: #{tpu_custom_call.1} parent=1 // pred_region
      %94 = dma.done [#allocation3], 768
    $region33: #{tpu_custom_call.1} parent=1 // pred_fallthru
      _
    // Predicated region
    $region34: #{tpu_custom_call.1} parent=1 // pred_check
      _
    $region35: #{tpu_custom_call.1} parent=1 // pred_check_branch
      %96 = sbr.rel (0) target = $region37
    $region36: #{tpu_custom_call.1} parent=1 // pred_region
      %98 = dma.done [#allocation6], 18432
    $region37: #{tpu_custom_call.1} parent=1 // pred_fallthru
      _
    // Predicated region
    $region38: #{tpu_custom_call.1} parent=1 // pred_check
      _
    $region39: #{tpu_custom_call.1} parent=1 // pred_check_branch
      %100 = sbr.rel (0) target = $region41
    $region40: #{tpu_custom_call.1} parent=1 // pred_region
      %102 = dma.done [#allocation6], 96
    $region41: #{tpu_custom_call.1} parent=1 // pred_fallthru
      _
    // Predicated region
    $region42: #{tpu_custom_call.1} parent=1 // pred_check
      _
    $region43: #{tpu_custom_call.1} parent=1 // pred_check_branch
      %104 = sbr.rel (0) target = $region45
    $region44: #{tpu_custom_call.1} parent=1 // pred_region
      %106 = dma.done [#allocation9], 18432
    $region45: #{tpu_custom_call.1} parent=1 // pred_fallthru
      _
    // Predicated region
    $region46: #{tpu_custom_call.1} parent=1 // pred_check
      _
    $region47: #{tpu_custom_call.1} parent=1 // pred_check_branch
      %108 = sbr.rel (0) target = $region49
    $region48: #{tpu_custom_call.1} parent=1 // pred_region
      %110 = dma.done [#allocation9], 48
    $region49: #{tpu_custom_call.1} parent=1 // pred_fallthru
      _
    // Predicated region
    $region50: #{tpu_custom_call.1} parent=1 // pred_check
      _
    $region51: #{tpu_custom_call.1} parent=1 // pred_check_branch
      %112 = sbr.rel (0) target = $region53
    $region52: #{tpu_custom_call.1} parent=1 // pred_region
      %114 = dma.done [#allocation12], 48
    $region53: #{tpu_custom_call.1} parent=1 // pred_fallthru
      _
    %v115 = vld [vmem:[#allocation7] sm:$0x3f]
    %v116 = vld [vmem:[%s4] sm:$0x7]
    %v117 = vld [vmem:[#allocation10] sm:$0x7]
    %v118 = vld [vmem:[#allocation11] sm:$0x7]
    %v119 = vld [vmem:[#allocation2] sm:$0xff]
    %v120 = vld [vmem:[#allocation2 + $0x8] sm:$0xff]
    %v121 = vld [vmem:[#allocation2 + $0x10] sm:$0xff]
    %v122 = vld [vmem:[#allocation2 + $0x18] sm:$0xff]
    %v123 = vld [vmem:[#allocation2 + $0x20] sm:$0xff]
    %v124 = vld [vmem:[#allocation2 + $0x28] sm:$0xff]
    %v125 = vpack.c.bf16 %v122, %v119
    %v126 = vpack.c.bf16 %v123, %v120
    %v127 = vpack.c.bf16 %v124, %v121
    %v128 = vld [vmem:[#allocation5] sm:$0xff]
    %v129 = vld [vmem:[#allocation5 + $0x8] sm:$0xff]
    %v130 = vld [vmem:[#allocation5 + $0x10] sm:$0xff]
    %v131 = vld [vmem:[#allocation5 + $0x18] sm:$0xff]
    %v132 = vld [vmem:[#allocation5 + $0x20] sm:$0xff]
    %v133 = vld [vmem:[#allocation5 + $0x28] sm:$0xff]
    %v134 = vld [vmem:[#allocation5 + $0x30] sm:$0xff]
    %v135 = vld [vmem:[#allocation5 + $0x38] sm:$0xff]
    %v136 = vld [vmem:[#allocation5 + $0x40] sm:$0xff]
    %v137 = vld [vmem:[#allocation5 + $0x48] sm:$0xff]
    %v138 = vld [vmem:[#allocation5 + $0x50] sm:$0xff]
    %v139 = vld [vmem:[#allocation5 + $0x58] sm:$0xff]
    %v140 = vld [vmem:[#allocation5 + $0x60] sm:$0xff]
    %v141 = vld [vmem:[#allocation5 + $0x68] sm:$0xff]
    %v142 = vld [vmem:[#allocation5 + $0x70] sm:$0xff]
    %v143 = vld [vmem:[#allocation5 + $0x78] sm:$0xff]
    %v144 = vld [vmem:[#allocation5 + $0x80] sm:$0xff]
    %v145 = vld [vmem:[#allocation5 + $0x88] sm:$0xff]
    %v146 = vld [vmem:[#allocation5 + $0x90] sm:$0xff]
    %v147 = vld [vmem:[#allocation5 + $0x98] sm:$0xff]
    %v148 = vld [vmem:[#allocation5 + $0xa0] sm:$0xff]
    %v149 = vld [vmem:[#allocation5 + $0xa8] sm:$0xff]
    %v150 = vld [vmem:[#allocation5 + $0xb0] sm:$0xff]
    %v151 = vld [vmem:[#allocation5 + $0xb8] sm:$0xff]
    %v152 = vld [vmem:[#allocation5 + $0xc0] sm:$0xff]
    %v153 = vld [vmem:[#allocation5 + $0xc8] sm:$0xff]
    %v154 = vld [vmem:[#allocation5 + $0xd0] sm:$0xff]
    %v155 = vld [vmem:[#allocation5 + $0xd8] sm:$0xff]
    %v156 = vld [vmem:[#allocation5 + $0xe0] sm:$0xff]
    %v157 = vld [vmem:[#allocation5 + $0xe8] sm:$0xff]
    %v158 = vld [vmem:[#allocation5 + $0xf0] sm:$0xff]
    %v159 = vld [vmem:[#allocation5 + $0xf8] sm:$0xff]
    %v160 = vld [vmem:[#allocation5 + $0x100] sm:$0xff]
    %v161 = vld [vmem:[#allocation5 + $0x108] sm:$0xff]
    %v162 = vld [vmem:[#allocation5 + $0x110] sm:$0xff]
    %v163 = vld [vmem:[#allocation5 + $0x118] sm:$0xff]
    %v164 = vld [vmem:[#allocation5 + $0x120] sm:$0xff]
    %v165 = vld [vmem:[#allocation5 + $0x128] sm:$0xff]
    %v166 = vld [vmem:[#allocation5 + $0x130] sm:$0xff]
    %v167 = vld [vmem:[#allocation5 + $0x138] sm:$0xff]
    %v168 = vld [vmem:[#allocation5 + $0x140] sm:$0xff]
    %v169 = vld [vmem:[#allocation5 + $0x148] sm:$0xff]
    %v170 = vld [vmem:[#allocation5 + $0x150] sm:$0xff]
    %v171 = vld [vmem:[#allocation5 + $0x158] sm:$0xff]
    %v172 = vld [vmem:[#allocation5 + $0x160] sm:$0xff]
    %v173 = vld [vmem:[#allocation5 + $0x168] sm:$0xff]
    %v174 = vld [vmem:[#allocation5 + $0x170] sm:$0xff]
    %v175 = vld [vmem:[#allocation5 + $0x178] sm:$0xff]
    %v176 = vld [vmem:[#allocation5 + $0x180] sm:$0xff]
    %v177 = vld [vmem:[#allocation5 + $0x188] sm:$0xff]
    %v178 = vld [vmem:[#allocation5 + $0x190] sm:$0xff]
    %v179 = vld [vmem:[#allocation5 + $0x198] sm:$0xff]
    %v180 = vld [vmem:[#allocation5 + $0x1a0] sm:$0xff]
    %v181 = vld [vmem:[#allocation5 + $0x1a8] sm:$0xff]
    %v182 = vld [vmem:[#allocation5 + $0x1b0] sm:$0xff]
    %v183 = vld [vmem:[#allocation5 + $0x1b8] sm:$0xff]
    %v184 = vld [vmem:[#allocation5 + $0x1c0] sm:$0xff]
    %v185 = vld [vmem:[#allocation5 + $0x1c8] sm:$0xff]
    %v186 = vld [vmem:[#allocation5 + $0x1d0] sm:$0xff]
    %v187 = vld [vmem:[#allocation5 + $0x1d8] sm:$0xff]
    %v188 = vld [vmem:[#allocation5 + $0x1e0] sm:$0xff]
    %v189 = vld [vmem:[#allocation5 + $0x1e8] sm:$0xff]
    %v190 = vld [vmem:[#allocation5 + $0x1f0] sm:$0xff]
    %v191 = vld [vmem:[#allocation5 + $0x1f8] sm:$0xff]
    %v192 = vld [vmem:[#allocation5 + $0x200] sm:$0xff]
    %v193 = vld [vmem:[#allocation5 + $0x208] sm:$0xff]
    %v194 = vld [vmem:[#allocation5 + $0x210] sm:$0xff]
    %v195 = vld [vmem:[#allocation5 + $0x218] sm:$0xff]
    %v196 = vld [vmem:[#allocation5 + $0x220] sm:$0xff]
    %v197 = vld [vmem:[#allocation5 + $0x228] sm:$0xff]
    %v198 = vld [vmem:[#allocation5 + $0x230] sm:$0xff]
    %v199 = vld [vmem:[#allocation5 + $0x238] sm:$0xff]
    %v200 = vld [vmem:[#allocation5 + $0x240] sm:$0xff]
    %v201 = vld [vmem:[#allocation5 + $0x248] sm:$0xff]
    %v202 = vld [vmem:[#allocation5 + $0x250] sm:$0xff]
    %v203 = vld [vmem:[#allocation5 + $0x258] sm:$0xff]
    %v204 = vld [vmem:[#allocation5 + $0x260] sm:$0xff]
    %v205 = vld [vmem:[#allocation5 + $0x268] sm:$0xff]
    %v206 = vld [vmem:[#allocation5 + $0x270] sm:$0xff]
    %v207 = vld [vmem:[#allocation5 + $0x278] sm:$0xff]
    %v208 = vld [vmem:[#allocation5 + $0x280] sm:$0xff]
    %v209 = vld [vmem:[#allocation5 + $0x288] sm:$0xff]
    %v210 = vld [vmem:[#allocation5 + $0x290] sm:$0xff]
    %v211 = vld [vmem:[#allocation5 + $0x298] sm:$0xff]
    %v212 = vld [vmem:[#allocation5 + $0x2a0] sm:$0xff]
    %v213 = vld [vmem:[#allocation5 + $0x2a8] sm:$0xff]
    %v214 = vld [vmem:[#allocation5 + $0x2b0] sm:$0xff]
    %v215 = vld [vmem:[#allocation5 + $0x2b8] sm:$0xff]
    %v216 = vld [vmem:[#allocation5 + $0x2c0] sm:$0xff]
    %v217 = vld [vmem:[#allocation5 + $0x2c8] sm:$0xff]
    %v218 = vld [vmem:[#allocation5 + $0x2d0] sm:$0xff]
    %v219 = vld [vmem:[#allocation5 + $0x2d8] sm:$0xff]
    %v220 = vld [vmem:[#allocation5 + $0x2e0] sm:$0xff]
    %v221 = vld [vmem:[#allocation5 + $0x2e8] sm:$0xff]
    %v222 = vld [vmem:[#allocation5 + $0x2f0] sm:$0xff]
    %v223 = vld [vmem:[#allocation5 + $0x2f8] sm:$0xff]
    %v224 = vld [vmem:[#allocation5 + $0x300] sm:$0xff]
    %v225 = vld [vmem:[#allocation5 + $0x308] sm:$0xff]
    %v226 = vld [vmem:[#allocation5 + $0x310] sm:$0xff]
    %v227 = vld [vmem:[#allocation5 + $0x318] sm:$0xff]
    %v228 = vld [vmem:[#allocation5 + $0x320] sm:$0xff]
    %v229 = vld [vmem:[#allocation5 + $0x328] sm:$0xff]
    %v230 = vld [vmem:[#allocation5 + $0x330] sm:$0xff]
    %v231 = vld [vmem:[#allocation5 + $0x338] sm:$0xff]
    %v232 = vld [vmem:[#allocation5 + $0x340] sm:$0xff]
    %v233 = vld [vmem:[#allocation5 + $0x348] sm:$0xff]
    %v234 = vld [vmem:[#allocation5 + $0x350] sm:$0xff]
    %v235 = vld [vmem:[#allocation5 + $0x358] sm:$0xff]
    %v236 = vld [vmem:[#allocation5 + $0x360] sm:$0xff]
    %v237 = vld [vmem:[#allocation5 + $0x368] sm:$0xff]
    %v238 = vld [vmem:[#allocation5 + $0x370] sm:$0xff]
    %v239 = vld [vmem:[#allocation5 + $0x378] sm:$0xff]
    %v240 = vld [vmem:[#allocation5 + $0x380] sm:$0xff]
    %v241 = vld [vmem:[#allocation5 + $0x388] sm:$0xff]
    %v242 = vld [vmem:[#allocation5 + $0x390] sm:$0xff]
    %v243 = vld [vmem:[#allocation5 + $0x398] sm:$0xff]
    %v244 = vld [vmem:[#allocation5 + $0x3a0] sm:$0xff]
    %v245 = vld [vmem:[#allocation5 + $0x3a8] sm:$0xff]
    %v246 = vld [vmem:[#allocation5 + $0x3b0] sm:$0xff]
    %v247 = vld [vmem:[#allocation5 + $0x3b8] sm:$0xff]
    %v248 = vld [vmem:[#allocation5 + $0x3c0] sm:$0xff]
    %v249 = vld [vmem:[#allocation5 + $0x3c8] sm:$0xff]
    %v250 = vld [vmem:[#allocation5 + $0x3d0] sm:$0xff]
    %v251 = vld [vmem:[#allocation5 + $0x3d8] sm:$0xff]
    %v252 = vld [vmem:[#allocation5 + $0x3e0] sm:$0xff]
    %v253 = vld [vmem:[#allocation5 + $0x3e8] sm:$0xff]
    %v254 = vld [vmem:[#allocation5 + $0x3f0] sm:$0xff]
    %v255 = vld [vmem:[#allocation5 + $0x3f8] sm:$0xff]
    %v256 = vld [vmem:[#allocation5 + $0x400] sm:$0xff]
    %v257 = vld [vmem:[#allocation5 + $0x408] sm:$0xff]
    %v258 = vld [vmem:[#allocation5 + $0x410] sm:$0xff]
    %v259 = vld [vmem:[#allocation5 + $0x418] sm:$0xff]
    %v260 = vld [vmem:[#allocation5 + $0x420] sm:$0xff]
    %v261 = vld [vmem:[#allocation5 + $0x428] sm:$0xff]
    %v262 = vld [vmem:[#allocation5 + $0x430] sm:$0xff]
    %v263 = vld [vmem:[#allocation5 + $0x438] sm:$0xff]
    %v264 = vld [vmem:[#allocation5 + $0x440] sm:$0xff]
    %v265 = vld [vmem:[#allocation5 + $0x448] sm:$0xff]
    %v266 = vld [vmem:[#allocation5 + $0x450] sm:$0xff]
    %v267 = vld [vmem:[#allocation5 + $0x458] sm:$0xff]
    %v268 = vld [vmem:[#allocation5 + $0x460] sm:$0xff]
    %v269 = vld [vmem:[#allocation5 + $0x468] sm:$0xff]
    %v270 = vld [vmem:[#allocation5 + $0x470] sm:$0xff]
    %v271 = vld [vmem:[#allocation5 + $0x478] sm:$0xff]
    %v273 = vperm.slane %v115, 0
    %v274 = vperm.slane %v115, 1
    %v275 = vperm.slane %v115, 2
    %v276 = vperm.slane %v115, 3
    %v277 = vperm.slane %v115, 4
    %v278 = vperm.slane %v115, 5
    %v429 = vunpack.c.l.b16 %v128
    %v430 = vunpack.c.h.b16 %v128
    %v431 = vunpack.c.l.b16 %v129
    %v432 = vunpack.c.h.b16 %v129
    %v433 = vunpack.c.l.b16 %v130
    %v434 = vunpack.c.h.b16 %v130
    %v435 = vunpack.c.l.b16 %v131
    %v436 = vunpack.c.h.b16 %v131
    %v437 = vunpack.c.l.b16 %v132
    %v438 = vunpack.c.h.b16 %v132
    %v439 = vunpack.c.l.b16 %v133
    %v440 = vunpack.c.h.b16 %v133
    %v441 = vunpack.c.l.b16 %v134
    %v442 = vunpack.c.h.b16 %v134
    %v443 = vunpack.c.l.b16 %v135
    %v444 = vunpack.c.h.b16 %v135
    %v445 = vunpack.c.l.b16 %v136
    %v446 = vunpack.c.h.b16 %v136
    %v447 = vunpack.c.l.b16 %v137
    %v448 = vunpack.c.h.b16 %v137
    %v449 = vunpack.c.l.b16 %v138
    %v450 = vunpack.c.h.b16 %v138
    %v451 = vunpack.c.l.b16 %v139
    %v452 = vunpack.c.h.b16 %v139
    %v453 = vunpack.c.l.b16 %v140
    %v454 = vunpack.c.h.b16 %v140
    %v455 = vunpack.c.l.b16 %v141
    %v456 = vunpack.c.h.b16 %v141
    %v457 = vunpack.c.l.b16 %v142
    %v458 = vunpack.c.h.b16 %v142
    %v459 = vunpack.c.l.b16 %v143
    %v460 = vunpack.c.h.b16 %v143
    %v461 = vunpack.c.l.b16 %v144
    %v462 = vunpack.c.h.b16 %v144
    %v463 = vunpack.c.l.b16 %v145
    %v464 = vunpack.c.h.b16 %v145
    %v465 = vunpack.c.l.b16 %v146
    %v466 = vunpack.c.h.b16 %v146
    %v467 = vunpack.c.l.b16 %v147
    %v468 = vunpack.c.h.b16 %v147
    %v469 = vunpack.c.l.b16 %v148
    %v470 = vunpack.c.h.b16 %v148
    %v471 = vunpack.c.l.b16 %v149
    %v472 = vunpack.c.h.b16 %v149
    %v473 = vunpack.c.l.b16 %v150
    %v474 = vunpack.c.h.b16 %v150
    %v475 = vunpack.c.l.b16 %v151
    %v476 = vunpack.c.h.b16 %v151
    %v477 = vunpack.c.l.b16 %v152
    %v478 = vunpack.c.h.b16 %v152
    %v479 = vunpack.c.l.b16 %v153
    %v480 = vunpack.c.h.b16 %v153
    %v481 = vunpack.c.l.b16 %v154
    %v482 = vunpack.c.h.b16 %v154
    %v483 = vunpack.c.l.b16 %v155
    %v484 = vunpack.c.h.b16 %v155
    %v485 = vunpack.c.l.b16 %v156
    %v486 = vunpack.c.h.b16 %v156
    %v487 = vunpack.c.l.b16 %v157
    %v488 = vunpack.c.h.b16 %v157
    %v489 = vunpack.c.l.b16 %v158
    %v490 = vunpack.c.h.b16 %v158
    %v491 = vunpack.c.l.b16 %v159
    %v492 = vunpack.c.h.b16 %v159
    %v493 = vunpack.c.l.b16 %v160
    %v494 = vunpack.c.h.b16 %v160
    %v495 = vunpack.c.l.b16 %v161
    %v496 = vunpack.c.h.b16 %v161
    %v497 = vunpack.c.l.b16 %v162
    %v498 = vunpack.c.h.b16 %v162
    %v499 = vunpack.c.l.b16 %v163
    %v500 = vunpack.c.h.b16 %v163
    %v501 = vunpack.c.l.b16 %v164
    %v502 = vunpack.c.h.b16 %v164
    %v503 = vunpack.c.l.b16 %v165
    %v504 = vunpack.c.h.b16 %v165
    %v505 = vunpack.c.l.b16 %v166
    %v506 = vunpack.c.h.b16 %v166
    %v507 = vunpack.c.l.b16 %v167
    %v508 = vunpack.c.h.b16 %v167
    %v509 = vunpack.c.l.b16 %v168
    %v510 = vunpack.c.h.b16 %v168
    %v511 = vunpack.c.l.b16 %v169
    %v512 = vunpack.c.h.b16 %v169
    %v513 = vunpack.c.l.b16 %v170
    %v514 = vunpack.c.h.b16 %v170
    %v515 = vunpack.c.l.b16 %v171
    %v516 = vunpack.c.h.b16 %v171
    %v517 = vunpack.c.l.b16 %v172
    %v518 = vunpack.c.h.b16 %v172
    %v519 = vunpack.c.l.b16 %v173
    %v520 = vunpack.c.h.b16 %v173
    %v521 = vunpack.c.l.b16 %v174
    %v522 = vunpack.c.h.b16 %v174
    %v523 = vunpack.c.l.b16 %v175
    %v524 = vunpack.c.h.b16 %v175
    %v525 = vunpack.c.l.b16 %v176
    %v526 = vunpack.c.h.b16 %v176
    %v527 = vunpack.c.l.b16 %v177
    %v528 = vunpack.c.h.b16 %v177
    %v529 = vunpack.c.l.b16 %v178
    %v530 = vunpack.c.h.b16 %v178
    %v531 = vunpack.c.l.b16 %v179
    %v532 = vunpack.c.h.b16 %v179
    %v533 = vunpack.c.l.b16 %v180
    %v534 = vunpack.c.h.b16 %v180
    %v535 = vunpack.c.l.b16 %v181
    %v536 = vunpack.c.h.b16 %v181
    %v537 = vunpack.c.l.b16 %v182
    %v538 = vunpack.c.h.b16 %v182
    %v539 = vunpack.c.l.b16 %v183
    %v540 = vunpack.c.h.b16 %v183
    %v541 = vunpack.c.l.b16 %v184
    %v542 = vunpack.c.h.b16 %v184
    %v543 = vunpack.c.l.b16 %v185
    %v544 = vunpack.c.h.b16 %v185
    %v545 = vunpack.c.l.b16 %v186
    %v546 = vunpack.c.h.b16 %v186
    %v547 = vunpack.c.l.b16 %v187
    %v548 = vunpack.c.h.b16 %v187
    %v549 = vunpack.c.l.b16 %v188
    %v550 = vunpack.c.h.b16 %v188
    %v551 = vunpack.c.l.b16 %v189
    %v552 = vunpack.c.h.b16 %v189
    %v553 = vunpack.c.l.b16 %v190
    %v554 = vunpack.c.h.b16 %v190
    %v555 = vunpack.c.l.b16 %v191
    %v556 = vunpack.c.h.b16 %v191
    %v557 = vunpack.c.l.b16 %v192
    %v558 = vunpack.c.h.b16 %v192
    %v559 = vunpack.c.l.b16 %v193
    %v560 = vunpack.c.h.b16 %v193
    %v561 = vunpack.c.l.b16 %v194
    %v562 = vunpack.c.h.b16 %v194
    %v563 = vunpack.c.l.b16 %v195
    %v564 = vunpack.c.h.b16 %v195
    %v565 = vunpack.c.l.b16 %v196
    %v566 = vunpack.c.h.b16 %v196
    %v567 = vunpack.c.l.b16 %v197
    %v568 = vunpack.c.h.b16 %v197
    %v569 = vunpack.c.l.b16 %v198
    %v570 = vunpack.c.h.b16 %v198
    %v571 = vunpack.c.l.b16 %v199
    %v572 = vunpack.c.h.b16 %v199
    %v573 = vunpack.c.l.b16 %v200
    %v574 = vunpack.c.h.b16 %v200
    %v575 = vunpack.c.l.b16 %v201
    %v576 = vunpack.c.h.b16 %v201
    %v577 = vunpack.c.l.b16 %v202
    %v578 = vunpack.c.h.b16 %v202
    %v579 = vunpack.c.l.b16 %v203
    %v580 = vunpack.c.h.b16 %v203
    %v581 = vunpack.c.l.b16 %v204
    %v582 = vunpack.c.h.b16 %v204
    %v583 = vunpack.c.l.b16 %v205
    %v584 = vunpack.c.h.b16 %v205
    %v585 = vunpack.c.l.b16 %v206
    %v586 = vunpack.c.h.b16 %v206
    %v587 = vunpack.c.l.b16 %v207
    %v588 = vunpack.c.h.b16 %v207
    %v589 = vunpack.c.l.b16 %v208
    %v590 = vunpack.c.h.b16 %v208
    %v591 = vunpack.c.l.b16 %v209
    %v592 = vunpack.c.h.b16 %v209
    %v593 = vunpack.c.l.b16 %v210
    %v594 = vunpack.c.h.b16 %v210
    %v595 = vunpack.c.l.b16 %v211
    %v596 = vunpack.c.h.b16 %v211
    %v597 = vunpack.c.l.b16 %v212
    %v598 = vunpack.c.h.b16 %v212
    %v599 = vunpack.c.l.b16 %v213
    %v600 = vunpack.c.h.b16 %v213
    %v601 = vunpack.c.l.b16 %v214
    %v602 = vunpack.c.h.b16 %v214
    %v603 = vunpack.c.l.b16 %v215
    %v604 = vunpack.c.h.b16 %v215
    %v605 = vunpack.c.l.b16 %v216
    %v606 = vunpack.c.h.b16 %v216
    %v607 = vunpack.c.l.b16 %v217
    %v608 = vunpack.c.h.b16 %v217
    %v609 = vunpack.c.l.b16 %v218
    %v610 = vunpack.c.h.b16 %v218
    %v611 = vunpack.c.l.b16 %v219
    %v612 = vunpack.c.h.b16 %v219
    %v613 = vunpack.c.l.b16 %v220
    %v614 = vunpack.c.h.b16 %v220
    %v615 = vunpack.c.l.b16 %v221
    %v616 = vunpack.c.h.b16 %v221
    %v617 = vunpack.c.l.b16 %v222
    %v618 = vunpack.c.h.b16 %v222
    %v619 = vunpack.c.l.b16 %v223
    %v620 = vunpack.c.h.b16 %v223
    %v621 = vunpack.c.l.b16 %v224
    %v622 = vunpack.c.h.b16 %v224
    %v623 = vunpack.c.l.b16 %v225
    %v624 = vunpack.c.h.b16 %v225
    %v625 = vunpack.c.l.b16 %v226
    %v626 = vunpack.c.h.b16 %v226
    %v627 = vunpack.c.l.b16 %v227
    %v628 = vunpack.c.h.b16 %v227
    %v629 = vunpack.c.l.b16 %v228
    %v630 = vunpack.c.h.b16 %v228
    %v631 = vunpack.c.l.b16 %v229
    %v632 = vunpack.c.h.b16 %v229
    %v633 = vunpack.c.l.b16 %v230
    %v634 = vunpack.c.h.b16 %v230
    %v635 = vunpack.c.l.b16 %v231
    %v636 = vunpack.c.h.b16 %v231
    %v637 = vunpack.c.l.b16 %v232
    %v638 = vunpack.c.h.b16 %v232
    %v639 = vunpack.c.l.b16 %v233
    %v640 = vunpack.c.h.b16 %v233
    %v641 = vunpack.c.l.b16 %v234
    %v642 = vunpack.c.h.b16 %v234
    %v643 = vunpack.c.l.b16 %v235
    %v644 = vunpack.c.h.b16 %v235
    %v645 = vunpack.c.l.b16 %v236
    %v646 = vunpack.c.h.b16 %v236
    %v647 = vunpack.c.l.b16 %v237
    %v648 = vunpack.c.h.b16 %v237
    %v649 = vunpack.c.l.b16 %v238
    %v650 = vunpack.c.h.b16 %v238
    %v651 = vunpack.c.l.b16 %v239
    %v652 = vunpack.c.h.b16 %v239
    %v653 = vunpack.c.l.b16 %v240
    %v654 = vunpack.c.h.b16 %v240
    %v655 = vunpack.c.l.b16 %v241
    %v656 = vunpack.c.h.b16 %v241
    %v657 = vunpack.c.l.b16 %v242
    %v658 = vunpack.c.h.b16 %v242
    %v659 = vunpack.c.l.b16 %v243
    %v660 = vunpack.c.h.b16 %v243
    %v661 = vunpack.c.l.b16 %v244
    %v662 = vunpack.c.h.b16 %v244
    %v663 = vunpack.c.l.b16 %v245
    %v664 = vunpack.c.h.b16 %v245
    %v665 = vunpack.c.l.b16 %v246
    %v666 = vunpack.c.h.b16 %v246
    %v667 = vunpack.c.l.b16 %v247
    %v668 = vunpack.c.h.b16 %v247
    %v669 = vunpack.c.l.b16 %v248
    %v670 = vunpack.c.h.b16 %v248
    %v671 = vunpack.c.l.b16 %v249
    %v672 = vunpack.c.h.b16 %v249
    %v673 = vunpack.c.l.b16 %v250
    %v674 = vunpack.c.h.b16 %v250
    %v675 = vunpack.c.l.b16 %v251
    %v676 = vunpack.c.h.b16 %v251
    %v677 = vunpack.c.l.b16 %v252
    %v678 = vunpack.c.h.b16 %v252
    %v679 = vunpack.c.l.b16 %v253
    %v680 = vunpack.c.h.b16 %v253
    %v681 = vunpack.c.l.b16 %v254
    %v682 = vunpack.c.h.b16 %v254
    %v683 = vunpack.c.l.b16 %v255
    %v684 = vunpack.c.h.b16 %v255
    %v685 = vunpack.c.l.b16 %v256
    %v686 = vunpack.c.h.b16 %v256
    %v687 = vunpack.c.l.b16 %v257
    %v688 = vunpack.c.h.b16 %v257
    %v689 = vunpack.c.l.b16 %v258
    %v690 = vunpack.c.h.b16 %v258
    %v691 = vunpack.c.l.b16 %v259
    %v692 = vunpack.c.h.b16 %v259
    %v693 = vunpack.c.l.b16 %v260
    %v694 = vunpack.c.h.b16 %v260
    %v695 = vunpack.c.l.b16 %v261
    %v696 = vunpack.c.h.b16 %v261
    %v697 = vunpack.c.l.b16 %v262
    %v698 = vunpack.c.h.b16 %v262
    %v699 = vunpack.c.l.b16 %v263
    %v700 = vunpack.c.h.b16 %v263
    %v701 = vunpack.c.l.b16 %v264
    %v702 = vunpack.c.h.b16 %v264
    %v703 = vunpack.c.l.b16 %v265
    %v704 = vunpack.c.h.b16 %v265
    %v705 = vunpack.c.l.b16 %v266
    %v706 = vunpack.c.h.b16 %v266
    %v707 = vunpack.c.l.b16 %v267
    %v708 = vunpack.c.h.b16 %v267
    %v709 = vunpack.c.l.b16 %v268
    %v710 = vunpack.c.h.b16 %v268
    %v711 = vunpack.c.l.b16 %v269
    %v712 = vunpack.c.h.b16 %v269
    %v713 = vunpack.c.l.b16 %v270
    %v714 = vunpack.c.h.b16 %v270
    %v715 = vunpack.c.l.b16 %v271
    %v716 = vunpack.c.h.b16 %v271
    %v717 = vpack.c.b16 %v435, %v429
    %v718 = vpack.c.b16 %v436, %v430
    %v719 = vpack.c.b16 %v437, %v431
    %v720 = vpack.c.b16 %v438, %v432
    %v721 = vpack.c.b16 %v439, %v433
    %v722 = vpack.c.b16 %v440, %v434
    %v723 = vpack.c.b16 %v447, %v441
    %v724 = vpack.c.b16 %v448, %v442
    %v725 = vpack.c.b16 %v449, %v443
    %v726 = vpack.c.b16 %v450, %v444
    %v727 = vpack.c.b16 %v451, %v445
    %v728 = vpack.c.b16 %v452, %v446
    %v729 = vpack.c.b16 %v459, %v453
    %v730 = vpack.c.b16 %v460, %v454
    %v731 = vpack.c.b16 %v461, %v455
    %v732 = vpack.c.b16 %v462, %v456
    %v733 = vpack.c.b16 %v463, %v457
    %v734 = vpack.c.b16 %v464, %v458
    %v735 = vpack.c.b16 %v471, %v465
    %v736 = vpack.c.b16 %v472, %v466
    %v737 = vpack.c.b16 %v473, %v467
    %v738 = vpack.c.b16 %v474, %v468
    %v739 = vpack.c.b16 %v475, %v469
    %v740 = vpack.c.b16 %v476, %v470
    %v741 = vpack.c.b16 %v483, %v477
    %v742 = vpack.c.b16 %v484, %v478
    %v743 = vpack.c.b16 %v485, %v479
    %v744 = vpack.c.b16 %v486, %v480
    %v745 = vpack.c.b16 %v487, %v481
    %v746 = vpack.c.b16 %v488, %v482
    %v747 = vpack.c.b16 %v495, %v489
    %v748 = vpack.c.b16 %v496, %v490
    %v749 = vpack.c.b16 %v497, %v491
    %v750 = vpack.c.b16 %v498, %v492
    %v751 = vpack.c.b16 %v499, %v493
    %v752 = vpack.c.b16 %v500, %v494
    %v753 = vpack.c.b16 %v507, %v501
    %v754 = vpack.c.b16 %v508, %v502
    %v755 = vpack.c.b16 %v509, %v503
    %v756 = vpack.c.b16 %v510, %v504
    %v757 = vpack.c.b16 %v511, %v505
    %v758 = vpack.c.b16 %v512, %v506
    %v759 = vpack.c.b16 %v519, %v513
    %v760 = vpack.c.b16 %v520, %v514
    %v761 = vpack.c.b16 %v521, %v515
    %v762 = vpack.c.b16 %v522, %v516
    %v763 = vpack.c.b16 %v523, %v517
    %v764 = vpack.c.b16 %v524, %v518
    %v765 = vpack.c.b16 %v531, %v525
    %v766 = vpack.c.b16 %v532, %v526
    %v767 = vpack.c.b16 %v533, %v527
    %v768 = vpack.c.b16 %v534, %v528
    %v769 = vpack.c.b16 %v535, %v529
    %v770 = vpack.c.b16 %v536, %v530
    %v771 = vpack.c.b16 %v543, %v537
    %v772 = vpack.c.b16 %v544, %v538
    %v773 = vpack.c.b16 %v545, %v539
    %v774 = vpack.c.b16 %v546, %v540
    %v775 = vpack.c.b16 %v547, %v541
    %v776 = vpack.c.b16 %v548, %v542
    %v777 = vpack.c.b16 %v555, %v549
    %v778 = vpack.c.b16 %v556, %v550
    %v779 = vpack.c.b16 %v557, %v551
    %v780 = vpack.c.b16 %v558, %v552
    %v781 = vpack.c.b16 %v559, %v553
    %v782 = vpack.c.b16 %v560, %v554
    %v783 = vpack.c.b16 %v567, %v561
    %v784 = vpack.c.b16 %v568, %v562
    %v785 = vpack.c.b16 %v569, %v563
    %v786 = vpack.c.b16 %v570, %v564
    %v787 = vpack.c.b16 %v571, %v565
    %v788 = vpack.c.b16 %v572, %v566
    %v789 = vpack.c.b16 %v579, %v573
    %v790 = vpack.c.b16 %v580, %v574
    %v791 = vpack.c.b16 %v581, %v575
    %v792 = vpack.c.b16 %v582, %v576
    %v793 = vpack.c.b16 %v583, %v577
    %v794 = vpack.c.b16 %v584, %v578
    %v795 = vpack.c.b16 %v591, %v585
    %v796 = vpack.c.b16 %v592, %v586
    %v797 = vpack.c.b16 %v593, %v587
    %v798 = vpack.c.b16 %v594, %v588
    %v799 = vpack.c.b16 %v595, %v589
    %v800 = vpack.c.b16 %v596, %v590
    %v801 = vpack.c.b16 %v603, %v597
    %v802 = vpack.c.b16 %v604, %v598
    %v803 = vpack.c.b16 %v605, %v599
    %v804 = vpack.c.b16 %v606, %v600
    %v805 = vpack.c.b16 %v607, %v601
    %v806 = vpack.c.b16 %v608, %v602
    %v807 = vpack.c.b16 %v615, %v609
    %v808 = vpack.c.b16 %v616, %v610
    %v809 = vpack.c.b16 %v617, %v611
    %v810 = vpack.c.b16 %v618, %v612
    %v811 = vpack.c.b16 %v619, %v613
    %v812 = vpack.c.b16 %v620, %v614
    %v813 = vpack.c.b16 %v627, %v621
    %v814 = vpack.c.b16 %v628, %v622
    %v815 = vpack.c.b16 %v629, %v623
    %v816 = vpack.c.b16 %v630, %v624
    %v817 = vpack.c.b16 %v631, %v625
    %v818 = vpack.c.b16 %v632, %v626
    %v819 = vpack.c.b16 %v639, %v633
    %v820 = vpack.c.b16 %v640, %v634
    %v821 = vpack.c.b16 %v641, %v635
    %v822 = vpack.c.b16 %v642, %v636
    %v823 = vpack.c.b16 %v643, %v637
    %v824 = vpack.c.b16 %v644, %v638
    %v825 = vpack.c.b16 %v651, %v645
    %v826 = vpack.c.b16 %v652, %v646
    %v827 = vpack.c.b16 %v653, %v647
    %v828 = vpack.c.b16 %v654, %v648
    %v829 = vpack.c.b16 %v655, %v649
    %v830 = vpack.c.b16 %v656, %v650
    %v831 = vpack.c.b16 %v663, %v657
    %v832 = vpack.c.b16 %v664, %v658
    %v833 = vpack.c.b16 %v665, %v659
    %v834 = vpack.c.b16 %v666, %v660
    %v835 = vpack.c.b16 %v667, %v661
    %v836 = vpack.c.b16 %v668, %v662
    %v837 = vpack.c.b16 %v675, %v669
    %v838 = vpack.c.b16 %v676, %v670
    %v839 = vpack.c.b16 %v677, %v671
    %v840 = vpack.c.b16 %v678, %v672
    %v841 = vpack.c.b16 %v679, %v673
    %v842 = vpack.c.b16 %v680, %v674
    %v843 = vpack.c.b16 %v687, %v681
    %v844 = vpack.c.b16 %v688, %v682
    %v845 = vpack.c.b16 %v689, %v683
    %v846 = vpack.c.b16 %v690, %v684
    %v847 = vpack.c.b16 %v691, %v685
    %v848 = vpack.c.b16 %v692, %v686
    %v849 = vpack.c.b16 %v699, %v693
    %v850 = vpack.c.b16 %v700, %v694
    %v851 = vpack.c.b16 %v701, %v695
    %v852 = vpack.c.b16 %v702, %v696
    %v853 = vpack.c.b16 %v703, %v697
    %v854 = vpack.c.b16 %v704, %v698
    %v855 = vpack.c.b16 %v711, %v705
    %v856 = vpack.c.b16 %v712, %v706
    %v857 = vpack.c.b16 %v713, %v707
    %v858 = vpack.c.b16 %v714, %v708
    %v859 = vpack.c.b16 %v715, %v709
    %v860 = vpack.c.b16 %v716, %v710
    %1005 = vmatpush.bf16.msra.mxu0 %v759
    %1006 = vmatpush.bf16.msra.mxu0 %v753
    %1007 = vmatpush.bf16.msra.mxu0 %v747
    %1008 = vmatpush.bf16.msra.mxu0 %v741
    %1009 = vmatpush.bf16.msra.mxu0 %v735
    %1010 = vmatpush.bf16.msra.mxu0 %v729
    %1011 = vmatpush.bf16.msra.mxu0 %v723
    %1012 = vmatpush.bf16.msra.mxu0 %v717
    %1013 = vmatmul.bf16.gmra.mxu0 %v125
    %v1014 = vpop.f32.mrf.mxu0
    %v1015 = vadd.f32 %v273, %v1014
    %v1016 = vpop.f32.mrf.mxu0
    %v1017 = vadd.f32 %v273, %v1016
    %1018 = vdwg.mxu0
    %1019 = vmatpush.bf16.msra.mxu0 %v807
    %1020 = vmatpush.bf16.msra.mxu0 %v801
    %1021 = vmatpush.bf16.msra.mxu0 %v795
    %1022 = vmatpush.bf16.msra.mxu0 %v789
    %1023 = vmatpush.bf16.msra.mxu0 %v783
    %1024 = vmatpush.bf16.msra.mxu0 %v777
    %1025 = vmatpush.bf16.msra.mxu0 %v771
    %1026 = vmatpush.bf16.msra.mxu0 %v765
    %1027 = vmatmul.bf16.gmra.mxu0 %v126
    %v1028 = vpop.f32.mrf.mxu0
    %v1029 = vadd.f32 %v1015, %v1028
    %v1030 = vpop.f32.mrf.mxu0
    %v1031 = vadd.f32 %v1017, %v1030
    %1032 = vdwg.mxu0
    %1033 = vmatpush.bf16.msra.mxu0 %v855
    %1034 = vmatpush.bf16.msra.mxu0 %v849
    %1035 = vmatpush.bf16.msra.mxu0 %v843
    %1036 = vmatpush.bf16.msra.mxu0 %v837
    %1037 = vmatpush.bf16.msra.mxu0 %v831
    %1038 = vmatpush.bf16.msra.mxu0 %v825
    %1039 = vmatpush.bf16.msra.mxu0 %v819
    %1040 = vmatpush.bf16.msra.mxu0 %v813
    %1041 = vmatmul.bf16.gmra.mxu0 %v127
    %v1042 = vpop.f32.mrf.mxu0
    %v1043 = vadd.f32 %v1029, %v1042
    %v1044 = vpop.f32.mrf.mxu0
    %v1045 = vadd.f32 %v1031, %v1044
    %1046 = vdwg.mxu0
    %1047 = vmatpush.bf16.msra.mxu0 %v760
    %1048 = vmatpush.bf16.msra.mxu0 %v754
    %1049 = vmatpush.bf16.msra.mxu0 %v748
    %1050 = vmatpush.bf16.msra.mxu0 %v742
    %1051 = vmatpush.bf16.msra.mxu0 %v736
    %1052 = vmatpush.bf16.msra.mxu0 %v730
    %1053 = vmatpush.bf16.msra.mxu0 %v724
    %1054 = vmatpush.bf16.msra.mxu0 %v718
    %1055 = vmatmul.bf16.gmra.mxu0 %v125
    %v1056 = vpop.f32.mrf.mxu0
    %v1057 = vadd.f32 %v274, %v1056
    %v1058 = vpop.f32.mrf.mxu0
    %v1059 = vadd.f32 %v274, %v1058
    %1060 = vdwg.mxu0
    %1061 = vmatpush.bf16.msra.mxu0 %v808
    %1062 = vmatpush.bf16.msra.mxu0 %v802
    %1063 = vmatpush.bf16.msra.mxu0 %v796
    %1064 = vmatpush.bf16.msra.mxu0 %v790
    %1065 = vmatpush.bf16.msra.mxu0 %v784
    %1066 = vmatpush.bf16.msra.mxu0 %v778
    %1067 = vmatpush.bf16.msra.mxu0 %v772
    %1068 = vmatpush.bf16.msra.mxu0 %v766
    %1069 = vmatmul.bf16.gmra.mxu0 %v126
    %v1070 = vpop.f32.mrf.mxu0
    %v1071 = vadd.f32 %v1057, %v1070
    %v1072 = vpop.f32.mrf.mxu0
    %v1073 = vadd.f32 %v1059, %v1072
    %1074 = vdwg.mxu0
    %1075 = vmatpush.bf16.msra.mxu0 %v856
    %1076 = vmatpush.bf16.msra.mxu0 %v850
    %1077 = vmatpush.bf16.msra.mxu0 %v844
    %1078 = vmatpush.bf16.msra.mxu0 %v838
    %1079 = vmatpush.bf16.msra.mxu0 %v832
    %1080 = vmatpush.bf16.msra.mxu0 %v826
    %1081 = vmatpush.bf16.msra.mxu0 %v820
    %1082 = vmatpush.bf16.msra.mxu0 %v814
    %1083 = vmatmul.bf16.gmra.mxu0 %v127
    %v1084 = vpop.f32.mrf.mxu0
    %v1085 = vadd.f32 %v1071, %v1084
    %v1086 = vpop.f32.mrf.mxu0
    %v1087 = vadd.f32 %v1073, %v1086
    %1088 = vdwg.mxu0
    %1089 = vmatpush.bf16.msra.mxu0 %v761
    %1090 = vmatpush.bf16.msra.mxu0 %v755
    %1091 = vmatpush.bf16.msra.mxu0 %v749
    %1092 = vmatpush.bf16.msra.mxu0 %v743
    %1093 = vmatpush.bf16.msra.mxu0 %v737
    %1094 = vmatpush.bf16.msra.mxu0 %v731
    %1095 = vmatpush.bf16.msra.mxu0 %v725
    %1096 = vmatpush.bf16.msra.mxu0 %v719
    %1097 = vmatmul.bf16.gmra.mxu0 %v125
    %v1098 = vpop.f32.mrf.mxu0
    %v1099 = vadd.f32 %v275, %v1098
    %v1100 = vpop.f32.mrf.mxu0
    %v1101 = vadd.f32 %v275, %v1100
    %1102 = vdwg.mxu0
    %1103 = vmatpush.bf16.msra.mxu0 %v809
    %1104 = vmatpush.bf16.msra.mxu0 %v803
    %1105 = vmatpush.bf16.msra.mxu0 %v797
    %1106 = vmatpush.bf16.msra.mxu0 %v791
    %1107 = vmatpush.bf16.msra.mxu0 %v785
    %1108 = vmatpush.bf16.msra.mxu0 %v779
    %1109 = vmatpush.bf16.msra.mxu0 %v773
    %1110 = vmatpush.bf16.msra.mxu0 %v767
    %1111 = vmatmul.bf16.gmra.mxu0 %v126
    %v1112 = vpop.f32.mrf.mxu0
    %v1113 = vadd.f32 %v1099, %v1112
    %v1114 = vpop.f32.mrf.mxu0
    %v1115 = vadd.f32 %v1101, %v1114
    %1116 = vdwg.mxu0
    %1117 = vmatpush.bf16.msra.mxu0 %v857
    %1118 = vmatpush.bf16.msra.mxu0 %v851
    %1119 = vmatpush.bf16.msra.mxu0 %v845
    %1120 = vmatpush.bf16.msra.mxu0 %v839
    %1121 = vmatpush.bf16.msra.mxu0 %v833
    %1122 = vmatpush.bf16.msra.mxu0 %v827
    %1123 = vmatpush.bf16.msra.mxu0 %v821
    %1124 = vmatpush.bf16.msra.mxu0 %v815
    %1125 = vmatmul.bf16.gmra.mxu0 %v127
    %v1126 = vpop.f32.mrf.mxu0
    %v1127 = vadd.f32 %v1113, %v1126
    %v1128 = vpop.f32.mrf.mxu0
    %v1129 = vadd.f32 %v1115, %v1128
    %1130 = vdwg.mxu0
    %1131 = vmatpush.bf16.msra.mxu0 %v762
    %1132 = vmatpush.bf16.msra.mxu0 %v756
    %1133 = vmatpush.bf16.msra.mxu0 %v750
    %1134 = vmatpush.bf16.msra.mxu0 %v744
    %1135 = vmatpush.bf16.msra.mxu0 %v738
    %1136 = vmatpush.bf16.msra.mxu0 %v732
    %1137 = vmatpush.bf16.msra.mxu0 %v726
    %1138 = vmatpush.bf16.msra.mxu0 %v720
    %1139 = vmatmul.bf16.gmra.mxu0 %v125
    %v1140 = vpop.f32.mrf.mxu0
    %v1141 = vadd.f32 %v276, %v1140
    %v1142 = vpop.f32.mrf.mxu0
    %v1143 = vadd.f32 %v276, %v1142
    %1144 = vdwg.mxu0
    %1145 = vmatpush.bf16.msra.mxu0 %v810
    %1146 = vmatpush.bf16.msra.mxu0 %v804
    %1147 = vmatpush.bf16.msra.mxu0 %v798
    %1148 = vmatpush.bf16.msra.mxu0 %v792
    %1149 = vmatpush.bf16.msra.mxu0 %v786
    %1150 = vmatpush.bf16.msra.mxu0 %v780
    %1151 = vmatpush.bf16.msra.mxu0 %v774
    %1152 = vmatpush.bf16.msra.mxu0 %v768
    %1153 = vmatmul.bf16.gmra.mxu0 %v126
    %v1154 = vpop.f32.mrf.mxu0
    %v1155 = vadd.f32 %v1141, %v1154
    %v1156 = vpop.f32.mrf.mxu0
    %v1157 = vadd.f32 %v1143, %v1156
    %1158 = vdwg.mxu0
    %1159 = vmatpush.bf16.msra.mxu0 %v858
    %1160 = vmatpush.bf16.msra.mxu0 %v852
    %1161 = vmatpush.bf16.msra.mxu0 %v846
    %1162 = vmatpush.bf16.msra.mxu0 %v840
    %1163 = vmatpush.bf16.msra.mxu0 %v834
    %1164 = vmatpush.bf16.msra.mxu0 %v828
    %1165 = vmatpush.bf16.msra.mxu0 %v822
    %1166 = vmatpush.bf16.msra.mxu0 %v816
    %1167 = vmatmul.bf16.gmra.mxu0 %v127
    %v1168 = vpop.f32.mrf.mxu0
    %v1169 = vadd.f32 %v1155, %v1168
    %v1170 = vpop.f32.mrf.mxu0
    %v1171 = vadd.f32 %v1157, %v1170
    %1172 = vdwg.mxu0
    %1173 = vmatpush.bf16.msra.mxu0 %v763
    %1174 = vmatpush.bf16.msra.mxu0 %v757
    %1175 = vmatpush.bf16.msra.mxu0 %v751
    %1176 = vmatpush.bf16.msra.mxu0 %v745
    %1177 = vmatpush.bf16.msra.mxu0 %v739
    %1178 = vmatpush.bf16.msra.mxu0 %v733
    %1179 = vmatpush.bf16.msra.mxu0 %v727
    %1180 = vmatpush.bf16.msra.mxu0 %v721
    %1181 = vmatmul.bf16.gmra.mxu0 %v125
    %v1182 = vpop.f32.mrf.mxu0
    %v1183 = vadd.f32 %v277, %v1182
    %v1184 = vpop.f32.mrf.mxu0
    %v1185 = vadd.f32 %v277, %v1184
    %1186 = vdwg.mxu0
    %1187 = vmatpush.bf16.msra.mxu0 %v811
    %1188 = vmatpush.bf16.msra.mxu0 %v805
    %1189 = vmatpush.bf16.msra.mxu0 %v799
    %1190 = vmatpush.bf16.msra.mxu0 %v793
    %1191 = vmatpush.bf16.msra.mxu0 %v787
    %1192 = vmatpush.bf16.msra.mxu0 %v781
    %1193 = vmatpush.bf16.msra.mxu0 %v775
    %1194 = vmatpush.bf16.msra.mxu0 %v769
    %1195 = vmatmul.bf16.gmra.mxu0 %v126
    %v1196 = vpop.f32.mrf.mxu0
    %v1197 = vadd.f32 %v1183, %v1196
    %v1198 = vpop.f32.mrf.mxu0
    %v1199 = vadd.f32 %v1185, %v1198
    %1200 = vdwg.mxu0
    %1201 = vmatpush.bf16.msra.mxu0 %v859
    %1202 = vmatpush.bf16.msra.mxu0 %v853
    %1203 = vmatpush.bf16.msra.mxu0 %v847
    %1204 = vmatpush.bf16.msra.mxu0 %v841
    %1205 = vmatpush.bf16.msra.mxu0 %v835
    %1206 = vmatpush.bf16.msra.mxu0 %v829
    %1207 = vmatpush.bf16.msra.mxu0 %v823
    %1208 = vmatpush.bf16.msra.mxu0 %v817
    %1209 = vmatmul.bf16.gmra.mxu0 %v127
    %v1210 = vpop.f32.mrf.mxu0
    %v1211 = vadd.f32 %v1197, %v1210
    %v1212 = vpop.f32.mrf.mxu0
    %v1213 = vadd.f32 %v1199, %v1212
    %1214 = vdwg.mxu0
    %1215 = vmatpush.bf16.msra.mxu0 %v764
    %1216 = vmatpush.bf16.msra.mxu0 %v758
    %1217 = vmatpush.bf16.msra.mxu0 %v752
    %1218 = vmatpush.bf16.msra.mxu0 %v746
    %1219 = vmatpush.bf16.msra.mxu0 %v740
    %1220 = vmatpush.bf16.msra.mxu0 %v734
    %1221 = vmatpush.bf16.msra.mxu0 %v728
    %1222 = vmatpush.bf16.msra.mxu0 %v722
    %1223 = vmatmul.bf16.gmra.mxu0 %v125
    %v1224 = vpop.f32.mrf.mxu0
    %v1225 = vadd.f32 %v278, %v1224
    %v1226 = vpop.f32.mrf.mxu0
    %v1227 = vadd.f32 %v278, %v1226
    %1228 = vdwg.mxu0
    %1229 = vmatpush.bf16.msra.mxu0 %v812
    %1230 = vmatpush.bf16.msra.mxu0 %v806
    %1231 = vmatpush.bf16.msra.mxu0 %v800
    %1232 = vmatpush.bf16.msra.mxu0 %v794
    %1233 = vmatpush.bf16.msra.mxu0 %v788
    %1234 = vmatpush.bf16.msra.mxu0 %v782
    %1235 = vmatpush.bf16.msra.mxu0 %v776
    %1236 = vmatpush.bf16.msra.mxu0 %v770
    %1237 = vmatmul.bf16.gmra.mxu0 %v126
    %v1238 = vpop.f32.mrf.mxu0
    %v1239 = vadd.f32 %v1225, %v1238
    %v1240 = vpop.f32.mrf.mxu0
    %v1241 = vadd.f32 %v1227, %v1240
    %1242 = vdwg.mxu0
    %1243 = vmatpush.bf16.msra.mxu0 %v860
    %1244 = vmatpush.bf16.msra.mxu0 %v854
    %1245 = vmatpush.bf16.msra.mxu0 %v848
    %1246 = vmatpush.bf16.msra.mxu0 %v842
    %1247 = vmatpush.bf16.msra.mxu0 %v836
    %1248 = vmatpush.bf16.msra.mxu0 %v830
    %1249 = vmatpush.bf16.msra.mxu0 %v824
    %1250 = vmatpush.bf16.msra.mxu0 %v818
    %1251 = vmatmul.bf16.gmra.mxu0 %v127
    %v1252 = vpop.f32.mrf.mxu0
    %v1253 = vadd.f32 %v1239, %v1252
    %v1254 = vpop.f32.mrf.mxu0
    %v1255 = vadd.f32 %v1241, %v1254
    %1256 = vdwg.mxu0
    %v1257 = vmax.f32 %v1043, 0.0
    %v1258 = vmax.f32 %v1085, 0.0
    %v1259 = vmax.f32 %v1127, 0.0
    %v1260 = vmax.f32 %v1169, 0.0
    %v1261 = vmax.f32 %v1211, 0.0
    %v1262 = vmax.f32 %v1253, 0.0
    %v1263 = vmax.f32 %v1045, 0.0
    %v1264 = vmax.f32 %v1087, 0.0
    %v1265 = vmax.f32 %v1129, 0.0
    %v1266 = vmax.f32 %v1171, 0.0
    %v1267 = vmax.f32 %v1213, 0.0
    %v1268 = vmax.f32 %v1255, 0.0
    %v1269 = vpack.c.bf16 %v1263, %v1257
    %v1270 = vpack.c.bf16 %v1264, %v1258
    %v1271 = vpack.c.bf16 %v1265, %v1259
    %v1272 = vpack.c.bf16 %v1266, %v1260
    %v1273 = vpack.c.bf16 %v1267, %v1261
    %v1274 = vpack.c.bf16 %v1268, %v1262
    %v1275 = vld [vmem:[#allocation8] sm:$0xff]
    %v1276 = vld [vmem:[#allocation8 + $0x8] sm:$0xf]
    %v1277 = vld [vmem:[#allocation8 + $0xc] sm:$0xff]
    %v1278 = vld [vmem:[#allocation8 + $0x14] sm:$0xf]
    %v1279 = vld [vmem:[#allocation8 + $0x18] sm:$0xff]
    %v1280 = vld [vmem:[#allocation8 + $0x20] sm:$0xf]
    %v1281 = vld [vmem:[#allocation8 + $0x24] sm:$0xff]
    %v1282 = vld [vmem:[#allocation8 + $0x2c] sm:$0xf]
    %v1283 = vld [vmem:[#allocation8 + $0x30] sm:$0xff]
    %v1284 = vld [vmem:[#allocation8 + $0x38] sm:$0xf]
    %v1285 = vld [vmem:[#allocation8 + $0x3c] sm:$0xff]
    %v1286 = vld [vmem:[#allocation8 + $0x44] sm:$0xf]
    %v1287 = vld [vmem:[#allocation8 + $0x48] sm:$0xff]
    %v1288 = vld [vmem:[#allocation8 + $0x50] sm:$0xf]
    %v1289 = vld [vmem:[#allocation8 + $0x54] sm:$0xff]
    %v1290 = vld [vmem:[#allocation8 + $0x5c] sm:$0xf]
    %v1291 = vld [vmem:[#allocation8 + $0x60] sm:$0xff]
    %v1292 = vld [vmem:[#allocation8 + $0x68] sm:$0xf]
    %v1293 = vld [vmem:[#allocation8 + $0x6c] sm:$0xff]
    %v1294 = vld [vmem:[#allocation8 + $0x74] sm:$0xf]
    %v1295 = vld [vmem:[#allocation8 + $0x78] sm:$0xff]
    %v1296 = vld [vmem:[#allocation8 + $0x80] sm:$0xf]
    %v1297 = vld [vmem:[#allocation8 + $0x84] sm:$0xff]
    %v1298 = vld [vmem:[#allocation8 + $0x8c] sm:$0xf]
    %v1299 = vld [vmem:[#allocation8 + $0x90] sm:$0xff]
    %v1300 = vld [vmem:[#allocation8 + $0x98] sm:$0xf]
    %v1301 = vld [vmem:[#allocation8 + $0x9c] sm:$0xff]
    %v1302 = vld [vmem:[#allocation8 + $0xa4] sm:$0xf]
    %v1303 = vld [vmem:[#allocation8 + $0xa8] sm:$0xff]
    %v1304 = vld [vmem:[#allocation8 + $0xb0] sm:$0xf]
    %v1305 = vld [vmem:[#allocation8 + $0xb4] sm:$0xff]
    %v1306 = vld [vmem:[#allocation8 + $0xbc] sm:$0xf]
    %v1307 = vld [vmem:[#allocation8 + $0xc0] sm:$0xff]
    %v1308 = vld [vmem:[#allocation8 + $0xc8] sm:$0xf]
    %v1309 = vld [vmem:[#allocation8 + $0xcc] sm:$0xff]
    %v1310 = vld [vmem:[#allocation8 + $0xd4] sm:$0xf]
    %v1311 = vld [vmem:[#allocation8 + $0xd8] sm:$0xff]
    %v1312 = vld [vmem:[#allocation8 + $0xe0] sm:$0xf]
    %v1313 = vld [vmem:[#allocation8 + $0xe4] sm:$0xff]
    %v1314 = vld [vmem:[#allocation8 + $0xec] sm:$0xf]
    %v1315 = vld [vmem:[#allocation8 + $0xf0] sm:$0xff]
    %v1316 = vld [vmem:[#allocation8 + $0xf8] sm:$0xf]
    %v1317 = vld [vmem:[#allocation8 + $0xfc] sm:$0xff]
    %v1318 = vld [vmem:[#allocation8 + $0x104] sm:$0xf]
    %v1319 = vld [vmem:[#allocation8 + $0x108] sm:$0xff]
    %v1320 = vld [vmem:[#allocation8 + $0x110] sm:$0xf]
    %v1321 = vld [vmem:[#allocation8 + $0x114] sm:$0xff]
    %v1322 = vld [vmem:[#allocation8 + $0x11c] sm:$0xf]
    %v1323 = vld [vmem:[#allocation8 + $0x120] sm:$0xff]
    %v1324 = vld [vmem:[#allocation8 + $0x128] sm:$0xf]
    %v1325 = vld [vmem:[#allocation8 + $0x12c] sm:$0xff]
    %v1326 = vld [vmem:[#allocation8 + $0x134] sm:$0xf]
    %v1327 = vld [vmem:[#allocation8 + $0x138] sm:$0xff]
    %v1328 = vld [vmem:[#allocation8 + $0x140] sm:$0xf]
    %v1329 = vld [vmem:[#allocation8 + $0x144] sm:$0xff]
    %v1330 = vld [vmem:[#allocation8 + $0x14c] sm:$0xf]
    %v1331 = vld [vmem:[#allocation8 + $0x150] sm:$0xff]
    %v1332 = vld [vmem:[#allocation8 + $0x158] sm:$0xf]
    %v1333 = vld [vmem:[#allocation8 + $0x15c] sm:$0xff]
    %v1334 = vld [vmem:[#allocation8 + $0x164] sm:$0xf]
    %v1335 = vld [vmem:[#allocation8 + $0x168] sm:$0xff]
    %v1336 = vld [vmem:[#allocation8 + $0x170] sm:$0xf]
    %v1337 = vld [vmem:[#allocation8 + $0x174] sm:$0xff]
    %v1338 = vld [vmem:[#allocation8 + $0x17c] sm:$0xf]
    %v1339 = vld [vmem:[#allocation8 + $0x180] sm:$0xff]
    %v1340 = vld [vmem:[#allocation8 + $0x188] sm:$0xf]
    %v1341 = vld [vmem:[#allocation8 + $0x18c] sm:$0xff]
    %v1342 = vld [vmem:[#allocation8 + $0x194] sm:$0xf]
    %v1343 = vld [vmem:[#allocation8 + $0x198] sm:$0xff]
    %v1344 = vld [vmem:[#allocation8 + $0x1a0] sm:$0xf]
    %v1345 = vld [vmem:[#allocation8 + $0x1a4] sm:$0xff]
    %v1346 = vld [vmem:[#allocation8 + $0x1ac] sm:$0xf]
    %v1347 = vld [vmem:[#allocation8 + $0x1b0] sm:$0xff]
    %v1348 = vld [vmem:[#allocation8 + $0x1b8] sm:$0xf]
    %v1349 = vld [vmem:[#allocation8 + $0x1bc] sm:$0xff]
    %v1350 = vld [vmem:[#allocation8 + $0x1c4] sm:$0xf]
    %v1351 = vld [vmem:[#allocation8 + $0x1c8] sm:$0xff]
    %v1352 = vld [vmem:[#allocation8 + $0x1d0] sm:$0xf]
    %v1353 = vld [vmem:[#allocation8 + $0x1d4] sm:$0xff]
    %v1354 = vld [vmem:[#allocation8 + $0x1dc] sm:$0xf]
    %v1355 = vld [vmem:[#allocation8 + $0x1e0] sm:$0xff]
    %v1356 = vld [vmem:[#allocation8 + $0x1e8] sm:$0xf]
    %v1357 = vld [vmem:[#allocation8 + $0x1ec] sm:$0xff]
    %v1358 = vld [vmem:[#allocation8 + $0x1f4] sm:$0xf]
    %v1359 = vld [vmem:[#allocation8 + $0x1f8] sm:$0xff]
    %v1360 = vld [vmem:[#allocation8 + $0x200] sm:$0xf]
    %v1361 = vld [vmem:[#allocation8 + $0x204] sm:$0xff]
    %v1362 = vld [vmem:[#allocation8 + $0x20c] sm:$0xf]
    %v1363 = vld [vmem:[#allocation8 + $0x210] sm:$0xff]
    %v1364 = vld [vmem:[#allocation8 + $0x218] sm:$0xf]
    %v1365 = vld [vmem:[#allocation8 + $0x21c] sm:$0xff]
    %v1366 = vld [vmem:[#allocation8 + $0x224] sm:$0xf]
    %v1367 = vld [vmem:[#allocation8 + $0x228] sm:$0xff]
    %v1368 = vld [vmem:[#allocation8 + $0x230] sm:$0xf]
    %v1369 = vld [vmem:[#allocation8 + $0x234] sm:$0xff]
    %v1370 = vld [vmem:[#allocation8 + $0x23c] sm:$0xf]
    %v1371 = vld [vmem:[#allocation8 + $0x240] sm:$0xff]
    %v1372 = vld [vmem:[#allocation8 + $0x248] sm:$0xf]
    %v1373 = vld [vmem:[#allocation8 + $0x24c] sm:$0xff]
    %v1374 = vld [vmem:[#allocation8 + $0x254] sm:$0xf]
    %v1375 = vld [vmem:[#allocation8 + $0x258] sm:$0xff]
    %v1376 = vld [vmem:[#allocation8 + $0x260] sm:$0xf]
    %v1377 = vld [vmem:[#allocation8 + $0x264] sm:$0xff]
    %v1378 = vld [vmem:[#allocation8 + $0x26c] sm:$0xf]
    %v1379 = vld [vmem:[#allocation8 + $0x270] sm:$0xff]
    %v1380 = vld [vmem:[#allocation8 + $0x278] sm:$0xf]
    %v1381 = vld [vmem:[#allocation8 + $0x27c] sm:$0xff]
    %v1382 = vld [vmem:[#allocation8 + $0x284] sm:$0xf]
    %v1383 = vld [vmem:[#allocation8 + $0x288] sm:$0xff]
    %v1384 = vld [vmem:[#allocation8 + $0x290] sm:$0xf]
    %v1385 = vld [vmem:[#allocation8 + $0x294] sm:$0xff]
    %v1386 = vld [vmem:[#allocation8 + $0x29c] sm:$0xf]
    %v1387 = vld [vmem:[#allocation8 + $0x2a0] sm:$0xff]
    %v1388 = vld [vmem:[#allocation8 + $0x2a8] sm:$0xf]
    %v1389 = vld [vmem:[#allocation8 + $0x2ac] sm:$0xff]
    %v1390 = vld [vmem:[#allocation8 + $0x2b4] sm:$0xf]
    %v1391 = vld [vmem:[#allocation8 + $0x2b8] sm:$0xff]
    %v1392 = vld [vmem:[#allocation8 + $0x2c0] sm:$0xf]
    %v1393 = vld [vmem:[#allocation8 + $0x2c4] sm:$0xff]
    %v1394 = vld [vmem:[#allocation8 + $0x2cc] sm:$0xf]
    %v1395 = vld [vmem:[#allocation8 + $0x2d0] sm:$0xff]
    %v1396 = vld [vmem:[#allocation8 + $0x2d8] sm:$0xf]
    %v1397 = vld [vmem:[#allocation8 + $0x2dc] sm:$0xff]
    %v1398 = vld [vmem:[#allocation8 + $0x2e4] sm:$0xf]
    %v1399 = vld [vmem:[#allocation8 + $0x2e8] sm:$0xff]
    %v1400 = vld [vmem:[#allocation8 + $0x2f0] sm:$0xf]
    %v1401 = vld [vmem:[#allocation8 + $0x2f4] sm:$0xff]
    %v1402 = vld [vmem:[#allocation8 + $0x2fc] sm:$0xf]
    %v1403 = vld [vmem:[#allocation8 + $0x300] sm:$0xff]
    %v1404 = vld [vmem:[#allocation8 + $0x308] sm:$0xf]
    %v1405 = vld [vmem:[#allocation8 + $0x30c] sm:$0xff]
    %v1406 = vld [vmem:[#allocation8 + $0x314] sm:$0xf]
    %v1407 = vld [vmem:[#allocation8 + $0x318] sm:$0xff]
    %v1408 = vld [vmem:[#allocation8 + $0x320] sm:$0xf]
    %v1409 = vld [vmem:[#allocation8 + $0x324] sm:$0xff]
    %v1410 = vld [vmem:[#allocation8 + $0x32c] sm:$0xf]
    %v1411 = vld [vmem:[#allocation8 + $0x330] sm:$0xff]
    %v1412 = vld [vmem:[#allocation8 + $0x338] sm:$0xf]
    %v1413 = vld [vmem:[#allocation8 + $0x33c] sm:$0xff]
    %v1414 = vld [vmem:[#allocation8 + $0x344] sm:$0xf]
    %v1415 = vld [vmem:[#allocation8 + $0x348] sm:$0xff]
    %v1416 = vld [vmem:[#allocation8 + $0x350] sm:$0xf]
    %v1417 = vld [vmem:[#allocation8 + $0x354] sm:$0xff]
    %v1418 = vld [vmem:[#allocation8 + $0x35c] sm:$0xf]
    %v1419 = vld [vmem:[#allocation8 + $0x360] sm:$0xff]
    %v1420 = vld [vmem:[#allocation8 + $0x368] sm:$0xf]
    %v1421 = vld [vmem:[#allocation8 + $0x36c] sm:$0xff]
    %v1422 = vld [vmem:[#allocation8 + $0x374] sm:$0xf]
    %v1423 = vld [vmem:[#allocation8 + $0x378] sm:$0xff]
    %v1424 = vld [vmem:[#allocation8 + $0x380] sm:$0xf]
    %v1425 = vld [vmem:[#allocation8 + $0x384] sm:$0xff]
    %v1426 = vld [vmem:[#allocation8 + $0x38c] sm:$0xf]
    %v1427 = vld [vmem:[#allocation8 + $0x390] sm:$0xff]
    %v1428 = vld [vmem:[#allocation8 + $0x398] sm:$0xf]
    %v1429 = vld [vmem:[#allocation8 + $0x39c] sm:$0xff]
    %v1430 = vld [vmem:[#allocation8 + $0x3a4] sm:$0xf]
    %v1431 = vld [vmem:[#allocation8 + $0x3a8] sm:$0xff]
    %v1432 = vld [vmem:[#allocation8 + $0x3b0] sm:$0xf]
    %v1433 = vld [vmem:[#allocation8 + $0x3b4] sm:$0xff]
    %v1434 = vld [vmem:[#allocation8 + $0x3bc] sm:$0xf]
    %v1435 = vld [vmem:[#allocation8 + $0x3c0] sm:$0xff]
    %v1436 = vld [vmem:[#allocation8 + $0x3c8] sm:$0xf]
    %v1437 = vld [vmem:[#allocation8 + $0x3cc] sm:$0xff]
    %v1438 = vld [vmem:[#allocation8 + $0x3d4] sm:$0xf]
    %v1439 = vld [vmem:[#allocation8 + $0x3d8] sm:$0xff]
    %v1440 = vld [vmem:[#allocation8 + $0x3e0] sm:$0xf]
    %v1441 = vld [vmem:[#allocation8 + $0x3e4] sm:$0xff]
    %v1442 = vld [vmem:[#allocation8 + $0x3ec] sm:$0xf]
    %v1443 = vld [vmem:[#allocation8 + $0x3f0] sm:$0xff]
    %v1444 = vld [vmem:[#allocation8 + $0x3f8] sm:$0xf]
    %v1445 = vld [vmem:[#allocation8 + $0x3fc] sm:$0xff]
    %v1446 = vld [vmem:[#allocation8 + $0x404] sm:$0xf]
    %v1447 = vld [vmem:[#allocation8 + $0x408] sm:$0xff]
    %v1448 = vld [vmem:[#allocation8 + $0x410] sm:$0xf]
    %v1449 = vld [vmem:[#allocation8 + $0x414] sm:$0xff]
    %v1450 = vld [vmem:[#allocation8 + $0x41c] sm:$0xf]
    %v1451 = vld [vmem:[#allocation8 + $0x420] sm:$0xff]
    %v1452 = vld [vmem:[#allocation8 + $0x428] sm:$0xf]
    %v1453 = vld [vmem:[#allocation8 + $0x42c] sm:$0xff]
    %v1454 = vld [vmem:[#allocation8 + $0x434] sm:$0xf]
    %v1455 = vld [vmem:[#allocation8 + $0x438] sm:$0xff]
    %v1456 = vld [vmem:[#allocation8 + $0x440] sm:$0xf]
    %v1457 = vld [vmem:[#allocation8 + $0x444] sm:$0xff]
    %v1458 = vld [vmem:[#allocation8 + $0x44c] sm:$0xf]
    %v1459 = vld [vmem:[#allocation8 + $0x450] sm:$0xff]
    %v1460 = vld [vmem:[#allocation8 + $0x458] sm:$0xf]
    %v1461 = vld [vmem:[#allocation8 + $0x45c] sm:$0xff]
    %v1462 = vld [vmem:[#allocation8 + $0x464] sm:$0xf]
    %v1463 = vld [vmem:[#allocation8 + $0x468] sm:$0xff]
    %v1464 = vld [vmem:[#allocation8 + $0x470] sm:$0xf]
    %v1465 = vld [vmem:[#allocation8 + $0x474] sm:$0xff]
    %v1466 = vld [vmem:[#allocation8 + $0x47c] sm:$0xf]
    %v1468 = vperm.slane %v116, 0
    %v1469 = vperm.slane %v116, 1
    %v1470 = vperm.slane %v116, 2
    %v1666 = vunpack.c.l.b16 %v1275
    %v1667 = vunpack.c.h.b16 %v1275
    %v1668 = vunpack.c.l.b16 %v1276
    %v1669 = vunpack.c.l.b16 %v1277
    %v1670 = vunpack.c.h.b16 %v1277
    %v1671 = vunpack.c.l.b16 %v1278
    %v1672 = vunpack.c.l.b16 %v1279
    %v1673 = vunpack.c.h.b16 %v1279
    %v1674 = vunpack.c.l.b16 %v1280
    %v1675 = vunpack.c.l.b16 %v1281
    %v1676 = vunpack.c.h.b16 %v1281
    %v1677 = vunpack.c.l.b16 %v1282
    %v1678 = vunpack.c.l.b16 %v1283
    %v1679 = vunpack.c.h.b16 %v1283
    %v1680 = vunpack.c.l.b16 %v1284
    %v1681 = vunpack.c.l.b16 %v1285
    %v1682 = vunpack.c.h.b16 %v1285
    %v1683 = vunpack.c.l.b16 %v1286
    %v1684 = vunpack.c.l.b16 %v1287
    %v1685 = vunpack.c.h.b16 %v1287
    %v1686 = vunpack.c.l.b16 %v1288
    %v1687 = vunpack.c.l.b16 %v1289
    %v1688 = vunpack.c.h.b16 %v1289
    %v1689 = vunpack.c.l.b16 %v1290
    %v1690 = vunpack.c.l.b16 %v1291
    %v1691 = vunpack.c.h.b16 %v1291
    %v1692 = vunpack.c.l.b16 %v1292
    %v1693 = vunpack.c.l.b16 %v1293
    %v1694 = vunpack.c.h.b16 %v1293
    %v1695 = vunpack.c.l.b16 %v1294
    %v1696 = vunpack.c.l.b16 %v1295
    %v1697 = vunpack.c.h.b16 %v1295
    %v1698 = vunpack.c.l.b16 %v1296
    %v1699 = vunpack.c.l.b16 %v1297
    %v1700 = vunpack.c.h.b16 %v1297
    %v1701 = vunpack.c.l.b16 %v1298
    %v1702 = vunpack.c.l.b16 %v1299
    %v1703 = vunpack.c.h.b16 %v1299
    %v1704 = vunpack.c.l.b16 %v1300
    %v1705 = vunpack.c.l.b16 %v1301
    %v1706 = vunpack.c.h.b16 %v1301
    %v1707 = vunpack.c.l.b16 %v1302
    %v1708 = vunpack.c.l.b16 %v1303
    %v1709 = vunpack.c.h.b16 %v1303
    %v1710 = vunpack.c.l.b16 %v1304
    %v1711 = vunpack.c.l.b16 %v1305
    %v1712 = vunpack.c.h.b16 %v1305
    %v1713 = vunpack.c.l.b16 %v1306
    %v1714 = vunpack.c.l.b16 %v1307
    %v1715 = vunpack.c.h.b16 %v1307
    %v1716 = vunpack.c.l.b16 %v1308
    %v1717 = vunpack.c.l.b16 %v1309
    %v1718 = vunpack.c.h.b16 %v1309
    %v1719 = vunpack.c.l.b16 %v1310
    %v1720 = vunpack.c.l.b16 %v1311
    %v1721 = vunpack.c.h.b16 %v1311
    %v1722 = vunpack.c.l.b16 %v1312
    %v1723 = vunpack.c.l.b16 %v1313
    %v1724 = vunpack.c.h.b16 %v1313
    %v1725 = vunpack.c.l.b16 %v1314
    %v1726 = vunpack.c.l.b16 %v1315
    %v1727 = vunpack.c.h.b16 %v1315
    %v1728 = vunpack.c.l.b16 %v1316
    %v1729 = vunpack.c.l.b16 %v1317
    %v1730 = vunpack.c.h.b16 %v1317
    %v1731 = vunpack.c.l.b16 %v1318
    %v1732 = vunpack.c.l.b16 %v1319
    %v1733 = vunpack.c.h.b16 %v1319
    %v1734 = vunpack.c.l.b16 %v1320
    %v1735 = vunpack.c.l.b16 %v1321
    %v1736 = vunpack.c.h.b16 %v1321
    %v1737 = vunpack.c.l.b16 %v1322
    %v1738 = vunpack.c.l.b16 %v1323
    %v1739 = vunpack.c.h.b16 %v1323
    %v1740 = vunpack.c.l.b16 %v1324
    %v1741 = vunpack.c.l.b16 %v1325
    %v1742 = vunpack.c.h.b16 %v1325
    %v1743 = vunpack.c.l.b16 %v1326
    %v1744 = vunpack.c.l.b16 %v1327
    %v1745 = vunpack.c.h.b16 %v1327
    %v1746 = vunpack.c.l.b16 %v1328
    %v1747 = vunpack.c.l.b16 %v1329
    %v1748 = vunpack.c.h.b16 %v1329
    %v1749 = vunpack.c.l.b16 %v1330
    %v1750 = vunpack.c.l.b16 %v1331
    %v1751 = vunpack.c.h.b16 %v1331
    %v1752 = vunpack.c.l.b16 %v1332
    %v1753 = vunpack.c.l.b16 %v1333
    %v1754 = vunpack.c.h.b16 %v1333
    %v1755 = vunpack.c.l.b16 %v1334
    %v1756 = vunpack.c.l.b16 %v1335
    %v1757 = vunpack.c.h.b16 %v1335
    %v1758 = vunpack.c.l.b16 %v1336
    %v1759 = vunpack.c.l.b16 %v1337
    %v1760 = vunpack.c.h.b16 %v1337
    %v1761 = vunpack.c.l.b16 %v1338
    %v1762 = vunpack.c.l.b16 %v1339
    %v1763 = vunpack.c.h.b16 %v1339
    %v1764 = vunpack.c.l.b16 %v1340
    %v1765 = vunpack.c.l.b16 %v1341
    %v1766 = vunpack.c.h.b16 %v1341
    %v1767 = vunpack.c.l.b16 %v1342
    %v1768 = vunpack.c.l.b16 %v1343
    %v1769 = vunpack.c.h.b16 %v1343
    %v1770 = vunpack.c.l.b16 %v1344
    %v1771 = vunpack.c.l.b16 %v1345
    %v1772 = vunpack.c.h.b16 %v1345
    %v1773 = vunpack.c.l.b16 %v1346
    %v1774 = vunpack.c.l.b16 %v1347
    %v1775 = vunpack.c.h.b16 %v1347
    %v1776 = vunpack.c.l.b16 %v1348
    %v1777 = vunpack.c.l.b16 %v1349
    %v1778 = vunpack.c.h.b16 %v1349
    %v1779 = vunpack.c.l.b16 %v1350
    %v1780 = vunpack.c.l.b16 %v1351
    %v1781 = vunpack.c.h.b16 %v1351
    %v1782 = vunpack.c.l.b16 %v1352
    %v1783 = vunpack.c.l.b16 %v1353
    %v1784 = vunpack.c.h.b16 %v1353
    %v1785 = vunpack.c.l.b16 %v1354
    %v1786 = vunpack.c.l.b16 %v1355
    %v1787 = vunpack.c.h.b16 %v1355
    %v1788 = vunpack.c.l.b16 %v1356
    %v1789 = vunpack.c.l.b16 %v1357
    %v1790 = vunpack.c.h.b16 %v1357
    %v1791 = vunpack.c.l.b16 %v1358
    %v1792 = vunpack.c.l.b16 %v1359
    %v1793 = vunpack.c.h.b16 %v1359
    %v1794 = vunpack.c.l.b16 %v1360
    %v1795 = vunpack.c.l.b16 %v1361
    %v1796 = vunpack.c.h.b16 %v1361
    %v1797 = vunpack.c.l.b16 %v1362
    %v1798 = vunpack.c.l.b16 %v1363
    %v1799 = vunpack.c.h.b16 %v1363
    %v1800 = vunpack.c.l.b16 %v1364
    %v1801 = vunpack.c.l.b16 %v1365
    %v1802 = vunpack.c.h.b16 %v1365
    %v1803 = vunpack.c.l.b16 %v1366
    %v1804 = vunpack.c.l.b16 %v1367
    %v1805 = vunpack.c.h.b16 %v1367
    %v1806 = vunpack.c.l.b16 %v1368
    %v1807 = vunpack.c.l.b16 %v1369
    %v1808 = vunpack.c.h.b16 %v1369
    %v1809 = vunpack.c.l.b16 %v1370
    %v1810 = vunpack.c.l.b16 %v1371
    %v1811 = vunpack.c.h.b16 %v1371
    %v1812 = vunpack.c.l.b16 %v1372
    %v1813 = vunpack.c.l.b16 %v1373
    %v1814 = vunpack.c.h.b16 %v1373
    %v1815 = vunpack.c.l.b16 %v1374
    %v1816 = vunpack.c.l.b16 %v1375
    %v1817 = vunpack.c.h.b16 %v1375
    %v1818 = vunpack.c.l.b16 %v1376
    %v1819 = vunpack.c.l.b16 %v1377
    %v1820 = vunpack.c.h.b16 %v1377
    %v1821 = vunpack.c.l.b16 %v1378
    %v1822 = vunpack.c.l.b16 %v1379
    %v1823 = vunpack.c.h.b16 %v1379
    %v1824 = vunpack.c.l.b16 %v1380
    %v1825 = vunpack.c.l.b16 %v1381
    %v1826 = vunpack.c.h.b16 %v1381
    %v1827 = vunpack.c.l.b16 %v1382
    %v1828 = vunpack.c.l.b16 %v1383
    %v1829 = vunpack.c.h.b16 %v1383
    %v1830 = vunpack.c.l.b16 %v1384
    %v1831 = vunpack.c.l.b16 %v1385
    %v1832 = vunpack.c.h.b16 %v1385
    %v1833 = vunpack.c.l.b16 %v1386
    %v1834 = vunpack.c.l.b16 %v1387
    %v1835 = vunpack.c.h.b16 %v1387
    %v1836 = vunpack.c.l.b16 %v1388
    %v1837 = vunpack.c.l.b16 %v1389
    %v1838 = vunpack.c.h.b16 %v1389
    %v1839 = vunpack.c.l.b16 %v1390
    %v1840 = vunpack.c.l.b16 %v1391
    %v1841 = vunpack.c.h.b16 %v1391
    %v1842 = vunpack.c.l.b16 %v1392
    %v1843 = vunpack.c.l.b16 %v1393
    %v1844 = vunpack.c.h.b16 %v1393
    %v1845 = vunpack.c.l.b16 %v1394
    %v1846 = vunpack.c.l.b16 %v1395
    %v1847 = vunpack.c.h.b16 %v1395
    %v1848 = vunpack.c.l.b16 %v1396
    %v1849 = vunpack.c.l.b16 %v1397
    %v1850 = vunpack.c.h.b16 %v1397
    %v1851 = vunpack.c.l.b16 %v1398
    %v1852 = vunpack.c.l.b16 %v1399
    %v1853 = vunpack.c.h.b16 %v1399
    %v1854 = vunpack.c.l.b16 %v1400
    %v1855 = vunpack.c.l.b16 %v1401
    %v1856 = vunpack.c.h.b16 %v1401
    %v1857 = vunpack.c.l.b16 %v1402
    %v1858 = vunpack.c.l.b16 %v1403
    %v1859 = vunpack.c.h.b16 %v1403
    %v1860 = vunpack.c.l.b16 %v1404
    %v1861 = vunpack.c.l.b16 %v1405
    %v1862 = vunpack.c.h.b16 %v1405
    %v1863 = vunpack.c.l.b16 %v1406
    %v1864 = vunpack.c.l.b16 %v1407
    %v1865 = vunpack.c.h.b16 %v1407
    %v1866 = vunpack.c.l.b16 %v1408
    %v1867 = vunpack.c.l.b16 %v1409
    %v1868 = vunpack.c.h.b16 %v1409
    %v1869 = vunpack.c.l.b16 %v1410
    %v1870 = vunpack.c.l.b16 %v1411
    %v1871 = vunpack.c.h.b16 %v1411
    %v1872 = vunpack.c.l.b16 %v1412
    %v1873 = vunpack.c.l.b16 %v1413
    %v1874 = vunpack.c.h.b16 %v1413
    %v1875 = vunpack.c.l.b16 %v1414
    %v1876 = vunpack.c.l.b16 %v1415
    %v1877 = vunpack.c.h.b16 %v1415
    %v1878 = vunpack.c.l.b16 %v1416
    %v1879 = vunpack.c.l.b16 %v1417
    %v1880 = vunpack.c.h.b16 %v1417
    %v1881 = vunpack.c.l.b16 %v1418
    %v1882 = vunpack.c.l.b16 %v1419
    %v1883 = vunpack.c.h.b16 %v1419
    %v1884 = vunpack.c.l.b16 %v1420
    %v1885 = vunpack.c.l.b16 %v1421
    %v1886 = vunpack.c.h.b16 %v1421
    %v1887 = vunpack.c.l.b16 %v1422
    %v1888 = vunpack.c.l.b16 %v1423
    %v1889 = vunpack.c.h.b16 %v1423
    %v1890 = vunpack.c.l.b16 %v1424
    %v1891 = vunpack.c.l.b16 %v1425
    %v1892 = vunpack.c.h.b16 %v1425
    %v1893 = vunpack.c.l.b16 %v1426
    %v1894 = vunpack.c.l.b16 %v1427
    %v1895 = vunpack.c.h.b16 %v1427
    %v1896 = vunpack.c.l.b16 %v1428
    %v1897 = vunpack.c.l.b16 %v1429
    %v1898 = vunpack.c.h.b16 %v1429
    %v1899 = vunpack.c.l.b16 %v1430
    %v1900 = vunpack.c.l.b16 %v1431
    %v1901 = vunpack.c.h.b16 %v1431
    %v1902 = vunpack.c.l.b16 %v1432
    %v1903 = vunpack.c.l.b16 %v1433
    %v1904 = vunpack.c.h.b16 %v1433
    %v1905 = vunpack.c.l.b16 %v1434
    %v1906 = vunpack.c.l.b16 %v1435
    %v1907 = vunpack.c.h.b16 %v1435
    %v1908 = vunpack.c.l.b16 %v1436
    %v1909 = vunpack.c.l.b16 %v1437
    %v1910 = vunpack.c.h.b16 %v1437
    %v1911 = vunpack.c.l.b16 %v1438
    %v1912 = vunpack.c.l.b16 %v1439
    %v1913 = vunpack.c.h.b16 %v1439
    %v1914 = vunpack.c.l.b16 %v1440
    %v1915 = vunpack.c.l.b16 %v1441
    %v1916 = vunpack.c.h.b16 %v1441
    %v1917 = vunpack.c.l.b16 %v1442
    %v1918 = vunpack.c.l.b16 %v1443
    %v1919 = vunpack.c.h.b16 %v1443
    %v1920 = vunpack.c.l.b16 %v1444
    %v1921 = vunpack.c.l.b16 %v1445
    %v1922 = vunpack.c.h.b16 %v1445
    %v1923 = vunpack.c.l.b16 %v1446
    %v1924 = vunpack.c.l.b16 %v1447
    %v1925 = vunpack.c.h.b16 %v1447
    %v1926 = vunpack.c.l.b16 %v1448
    %v1927 = vunpack.c.l.b16 %v1449
    %v1928 = vunpack.c.h.b16 %v1449
    %v1929 = vunpack.c.l.b16 %v1450
    %v1930 = vunpack.c.l.b16 %v1451
    %v1931 = vunpack.c.h.b16 %v1451
    %v1932 = vunpack.c.l.b16 %v1452
    %v1933 = vunpack.c.l.b16 %v1453
    %v1934 = vunpack.c.h.b16 %v1453
    %v1935 = vunpack.c.l.b16 %v1454
    %v1936 = vunpack.c.l.b16 %v1455
    %v1937 = vunpack.c.h.b16 %v1455
    %v1938 = vunpack.c.l.b16 %v1456
    %v1939 = vunpack.c.l.b16 %v1457
    %v1940 = vunpack.c.h.b16 %v1457
    %v1941 = vunpack.c.l.b16 %v1458
    %v1942 = vunpack.c.l.b16 %v1459
    %v1943 = vunpack.c.h.b16 %v1459
    %v1944 = vunpack.c.l.b16 %v1460
    %v1945 = vunpack.c.l.b16 %v1461
    %v1946 = vunpack.c.h.b16 %v1461
    %v1947 = vunpack.c.l.b16 %v1462
    %v1948 = vunpack.c.l.b16 %v1463
    %v1949 = vunpack.c.h.b16 %v1463
    %v1950 = vunpack.c.l.b16 %v1464
    %v1951 = vunpack.c.l.b16 %v1465
    %v1952 = vunpack.c.h.b16 %v1465
    %v1953 = vunpack.c.l.b16 %v1466
    %v1954 = vpack.c.b16 %v1669, %v1666
    %v1955 = vpack.c.b16 %v1670, %v1667
    %v1956 = vpack.c.b16 %v1671, %v1668
    %v1957 = vpack.c.b16 %v1675, %v1672
    %v1958 = vpack.c.b16 %v1676, %v1673
    %v1959 = vpack.c.b16 %v1677, %v1674
    %v1960 = vpack.c.b16 %v1681, %v1678
    %v1961 = vpack.c.b16 %v1682, %v1679
    %v1962 = vpack.c.b16 %v1683, %v1680
    %v1963 = vpack.c.b16 %v1687, %v1684
    %v1964 = vpack.c.b16 %v1688, %v1685
    %v1965 = vpack.c.b16 %v1689, %v1686
    %v1966 = vpack.c.b16 %v1693, %v1690
    %v1967 = vpack.c.b16 %v1694, %v1691
    %v1968 = vpack.c.b16 %v1695, %v1692
    %v1969 = vpack.c.b16 %v1699, %v1696
    %v1970 = vpack.c.b16 %v1700, %v1697
    %v1971 = vpack.c.b16 %v1701, %v1698
    %v1972 = vpack.c.b16 %v1705, %v1702
    %v1973 = vpack.c.b16 %v1706, %v1703
    %v1974 = vpack.c.b16 %v1707, %v1704
    %v1975 = vpack.c.b16 %v1711, %v1708
    %v1976 = vpack.c.b16 %v1712, %v1709
    %v1977 = vpack.c.b16 %v1713, %v1710
    %v1978 = vpack.c.b16 %v1717, %v1714
    %v1979 = vpack.c.b16 %v1718, %v1715
    %v1980 = vpack.c.b16 %v1719, %v1716
    %v1981 = vpack.c.b16 %v1723, %v1720
    %v1982 = vpack.c.b16 %v1724, %v1721
    %v1983 = vpack.c.b16 %v1725, %v1722
    %v1984 = vpack.c.b16 %v1729, %v1726
    %v1985 = vpack.c.b16 %v1730, %v1727
    %v1986 = vpack.c.b16 %v1731, %v1728
    %v1987 = vpack.c.b16 %v1735, %v1732
    %v1988 = vpack.c.b16 %v1736, %v1733
    %v1989 = vpack.c.b16 %v1737, %v1734
    %v1990 = vpack.c.b16 %v1741, %v1738
    %v1991 = vpack.c.b16 %v1742, %v1739
    %v1992 = vpack.c.b16 %v1743, %v1740
    %v1993 = vpack.c.b16 %v1747, %v1744
    %v1994 = vpack.c.b16 %v1748, %v1745
    %v1995 = vpack.c.b16 %v1749, %v1746
    %v1996 = vpack.c.b16 %v1753, %v1750
    %v1997 = vpack.c.b16 %v1754, %v1751
    %v1998 = vpack.c.b16 %v1755, %v1752
    %v1999 = vpack.c.b16 %v1759, %v1756
    %v2000 = vpack.c.b16 %v1760, %v1757
    %v2001 = vpack.c.b16 %v1761, %v1758
    %v2002 = vpack.c.b16 %v1765, %v1762
    %v2003 = vpack.c.b16 %v1766, %v1763
    %v2004 = vpack.c.b16 %v1767, %v1764
    %v2005 = vpack.c.b16 %v1771, %v1768
    %v2006 = vpack.c.b16 %v1772, %v1769
    %v2007 = vpack.c.b16 %v1773, %v1770
    %v2008 = vpack.c.b16 %v1777, %v1774
    %v2009 = vpack.c.b16 %v1778, %v1775
    %v2010 = vpack.c.b16 %v1779, %v1776
    %v2011 = vpack.c.b16 %v1783, %v1780
    %v2012 = vpack.c.b16 %v1784, %v1781
    %v2013 = vpack.c.b16 %v1785, %v1782
    %v2014 = vpack.c.b16 %v1789, %v1786
    %v2015 = vpack.c.b16 %v1790, %v1787
    %v2016 = vpack.c.b16 %v1791, %v1788
    %v2017 = vpack.c.b16 %v1795, %v1792
    %v2018 = vpack.c.b16 %v1796, %v1793
    %v2019 = vpack.c.b16 %v1797, %v1794
    %v2020 = vpack.c.b16 %v1801, %v1798
    %v2021 = vpack.c.b16 %v1802, %v1799
    %v2022 = vpack.c.b16 %v1803, %v1800
    %v2023 = vpack.c.b16 %v1807, %v1804
    %v2024 = vpack.c.b16 %v1808, %v1805
    %v2025 = vpack.c.b16 %v1809, %v1806
    %v2026 = vpack.c.b16 %v1813, %v1810
    %v2027 = vpack.c.b16 %v1814, %v1811
    %v2028 = vpack.c.b16 %v1815, %v1812
    %v2029 = vpack.c.b16 %v1819, %v1816
    %v2030 = vpack.c.b16 %v1820, %v1817
    %v2031 = vpack.c.b16 %v1821, %v1818
    %v2032 = vpack.c.b16 %v1825, %v1822
    %v2033 = vpack.c.b16 %v1826, %v1823
    %v2034 = vpack.c.b16 %v1827, %v1824
    %v2035 = vpack.c.b16 %v1831, %v1828
    %v2036 = vpack.c.b16 %v1832, %v1829
    %v2037 = vpack.c.b16 %v1833, %v1830
    %v2038 = vpack.c.b16 %v1837, %v1834
    %v2039 = vpack.c.b16 %v1838, %v1835
    %v2040 = vpack.c.b16 %v1839, %v1836
    %v2041 = vpack.c.b16 %v1843, %v1840
    %v2042 = vpack.c.b16 %v1844, %v1841
    %v2043 = vpack.c.b16 %v1845, %v1842
    %v2044 = vpack.c.b16 %v1849, %v1846
    %v2045 = vpack.c.b16 %v1850, %v1847
    %v2046 = vpack.c.b16 %v1851, %v1848
    %v2047 = vpack.c.b16 %v1855, %v1852
    %v2048 = vpack.c.b16 %v1856, %v1853
    %v2049 = vpack.c.b16 %v1857, %v1854
    %v2050 = vpack.c.b16 %v1861, %v1858
    %v2051 = vpack.c.b16 %v1862, %v1859
    %v2052 = vpack.c.b16 %v1863, %v1860
    %v2053 = vpack.c.b16 %v1867, %v1864
    %v2054 = vpack.c.b16 %v1868, %v1865
    %v2055 = vpack.c.b16 %v1869, %v1866
    %v2056 = vpack.c.b16 %v1873, %v1870
    %v2057 = vpack.c.b16 %v1874, %v1871
    %v2058 = vpack.c.b16 %v1875, %v1872
    %v2059 = vpack.c.b16 %v1879, %v1876
    %v2060 = vpack.c.b16 %v1880, %v1877
    %v2061 = vpack.c.b16 %v1881, %v1878
    %v2062 = vpack.c.b16 %v1885, %v1882
    %v2063 = vpack.c.b16 %v1886, %v1883
    %v2064 = vpack.c.b16 %v1887, %v1884
    %v2065 = vpack.c.b16 %v1891, %v1888
    %v2066 = vpack.c.b16 %v1892, %v1889
    %v2067 = vpack.c.b16 %v1893, %v1890
    %v2068 = vpack.c.b16 %v1897, %v1894
    %v2069 = vpack.c.b16 %v1898, %v1895
    %v2070 = vpack.c.b16 %v1899, %v1896
    %v2071 = vpack.c.b16 %v1903, %v1900
    %v2072 = vpack.c.b16 %v1904, %v1901
    %v2073 = vpack.c.b16 %v1905, %v1902
    %v2074 = vpack.c.b16 %v1909, %v1906
    %v2075 = vpack.c.b16 %v1910, %v1907
    %v2076 = vpack.c.b16 %v1911, %v1908
    %v2077 = vpack.c.b16 %v1915, %v1912
    %v2078 = vpack.c.b16 %v1916, %v1913
    %v2079 = vpack.c.b16 %v1917, %v1914
    %v2080 = vpack.c.b16 %v1921, %v1918
    %v2081 = vpack.c.b16 %v1922, %v1919
    %v2082 = vpack.c.b16 %v1923, %v1920
    %v2083 = vpack.c.b16 %v1927, %v1924
    %v2084 = vpack.c.b16 %v1928, %v1925
    %v2085 = vpack.c.b16 %v1929, %v1926
    %v2086 = vpack.c.b16 %v1933, %v1930
    %v2087 = vpack.c.b16 %v1934, %v1931
    %v2088 = vpack.c.b16 %v1935, %v1932
    %v2089 = vpack.c.b16 %v1939, %v1936
    %v2090 = vpack.c.b16 %v1940, %v1937
    %v2091 = vpack.c.b16 %v1941, %v1938
    %v2092 = vpack.c.b16 %v1945, %v1942
    %v2093 = vpack.c.b16 %v1946, %v1943
    %v2094 = vpack.c.b16 %v1947, %v1944
    %v2095 = vpack.c.b16 %v1951, %v1948
    %v2096 = vpack.c.b16 %v1952, %v1949
    %v2097 = vpack.c.b16 %v1953, %v1950
    %2242 = vmatpush.bf16.msra.mxu0 %v1975
    %2243 = vmatpush.bf16.msra.mxu0 %v1972
    %2244 = vmatpush.bf16.msra.mxu0 %v1969
    %2245 = vmatpush.bf16.msra.mxu0 %v1966
    %2246 = vmatpush.bf16.msra.mxu0 %v1963
    %2247 = vmatpush.bf16.msra.mxu0 %v1960
    %2248 = vmatpush.bf16.msra.mxu0 %v1957
    %2249 = vmatpush.bf16.msra.mxu0 %v1954
    %2250 = vmatmul.bf16.gmra.mxu0 %v1269
    %v2251 = vpop.f32.mrf.mxu0
    %v2252 = vadd.f32 %v1468, %v2251
    %v2253 = vpop.f32.mrf.mxu0
    %v2254 = vadd.f32 %v1468, %v2253
    %2255 = vdwg.mxu0
    %2256 = vmatpush.bf16.msra.mxu0 %v1999
    %2257 = vmatpush.bf16.msra.mxu0 %v1996
    %2258 = vmatpush.bf16.msra.mxu0 %v1993
    %2259 = vmatpush.bf16.msra.mxu0 %v1990
    %2260 = vmatpush.bf16.msra.mxu0 %v1987
    %2261 = vmatpush.bf16.msra.mxu0 %v1984
    %2262 = vmatpush.bf16.msra.mxu0 %v1981
    %2263 = vmatpush.bf16.msra.mxu0 %v1978
    %2264 = vmatmul.bf16.gmra.mxu0 %v1270
    %v2265 = vpop.f32.mrf.mxu0
    %v2266 = vadd.f32 %v2252, %v2265
    %v2267 = vpop.f32.mrf.mxu0
    %v2268 = vadd.f32 %v2254, %v2267
    %2269 = vdwg.mxu0
    %2270 = vmatpush.bf16.msra.mxu0 %v2023
    %2271 = vmatpush.bf16.msra.mxu0 %v2020
    %2272 = vmatpush.bf16.msra.mxu0 %v2017
    %2273 = vmatpush.bf16.msra.mxu0 %v2014
    %2274 = vmatpush.bf16.msra.mxu0 %v2011
    %2275 = vmatpush.bf16.msra.mxu0 %v2008
    %2276 = vmatpush.bf16.msra.mxu0 %v2005
    %2277 = vmatpush.bf16.msra.mxu0 %v2002
    %2278 = vmatmul.bf16.gmra.mxu0 %v1271
    %v2279 = vpop.f32.mrf.mxu0
    %v2280 = vadd.f32 %v2266, %v2279
    %v2281 = vpop.f32.mrf.mxu0
    %v2282 = vadd.f32 %v2268, %v2281
    %2283 = vdwg.mxu0
    %2284 = vmatpush.bf16.msra.mxu0 %v2047
    %2285 = vmatpush.bf16.msra.mxu0 %v2044
    %2286 = vmatpush.bf16.msra.mxu0 %v2041
    %2287 = vmatpush.bf16.msra.mxu0 %v2038
    %2288 = vmatpush.bf16.msra.mxu0 %v2035
    %2289 = vmatpush.bf16.msra.mxu0 %v2032
    %2290 = vmatpush.bf16.msra.mxu0 %v2029
    %2291 = vmatpush.bf16.msra.mxu0 %v2026
    %2292 = vmatmul.bf16.gmra.mxu0 %v1272
    %v2293 = vpop.f32.mrf.mxu0
    %v2294 = vadd.f32 %v2280, %v2293
    %v2295 = vpop.f32.mrf.mxu0
    %v2296 = vadd.f32 %v2282, %v2295
    %2297 = vdwg.mxu0
    %2298 = vmatpush.bf16.msra.mxu0 %v2071
    %2299 = vmatpush.bf16.msra.mxu0 %v2068
    %2300 = vmatpush.bf16.msra.mxu0 %v2065
    %2301 = vmatpush.bf16.msra.mxu0 %v2062
    %2302 = vmatpush.bf16.msra.mxu0 %v2059
    %2303 = vmatpush.bf16.msra.mxu0 %v2056
    %2304 = vmatpush.bf16.msra.mxu0 %v2053
    %2305 = vmatpush.bf16.msra.mxu0 %v2050
    %2306 = vmatmul.bf16.gmra.mxu0 %v1273
    %v2307 = vpop.f32.mrf.mxu0
    %v2308 = vadd.f32 %v2294, %v2307
    %v2309 = vpop.f32.mrf.mxu0
    %v2310 = vadd.f32 %v2296, %v2309
    %2311 = vdwg.mxu0
    %2312 = vmatpush.bf16.msra.mxu0 %v2095
    %2313 = vmatpush.bf16.msra.mxu0 %v2092
    %2314 = vmatpush.bf16.msra.mxu0 %v2089
    %2315 = vmatpush.bf16.msra.mxu0 %v2086
    %2316 = vmatpush.bf16.msra.mxu0 %v2083
    %2317 = vmatpush.bf16.msra.mxu0 %v2080
    %2318 = vmatpush.bf16.msra.mxu0 %v2077
    %2319 = vmatpush.bf16.msra.mxu0 %v2074
    %2320 = vmatmul.bf16.gmra.mxu0 %v1274
    %v2321 = vpop.f32.mrf.mxu0
    %v2322 = vadd.f32 %v2308, %v2321
    %v2323 = vpop.f32.mrf.mxu0
    %v2324 = vadd.f32 %v2310, %v2323
    %2325 = vdwg.mxu0
    %2326 = vmatpush.bf16.msra.mxu0 %v1976
    %2327 = vmatpush.bf16.msra.mxu0 %v1973
    %2328 = vmatpush.bf16.msra.mxu0 %v1970
    %2329 = vmatpush.bf16.msra.mxu0 %v1967
    %2330 = vmatpush.bf16.msra.mxu0 %v1964
    %2331 = vmatpush.bf16.msra.mxu0 %v1961
    %2332 = vmatpush.bf16.msra.mxu0 %v1958
    %2333 = vmatpush.bf16.msra.mxu0 %v1955
    %2334 = vmatmul.bf16.gmra.mxu0 %v1269
    %v2335 = vpop.f32.mrf.mxu0
    %v2336 = vadd.f32 %v1469, %v2335
    %v2337 = vpop.f32.mrf.mxu0
    %v2338 = vadd.f32 %v1469, %v2337
    %2339 = vdwg.mxu0
    %2340 = vmatpush.bf16.msra.mxu0 %v2000
    %2341 = vmatpush.bf16.msra.mxu0 %v1997
    %2342 = vmatpush.bf16.msra.mxu0 %v1994
    %2343 = vmatpush.bf16.msra.mxu0 %v1991
    %2344 = vmatpush.bf16.msra.mxu0 %v1988
    %2345 = vmatpush.bf16.msra.mxu0 %v1985
    %2346 = vmatpush.bf16.msra.mxu0 %v1982
    %2347 = vmatpush.bf16.msra.mxu0 %v1979
    %2348 = vmatmul.bf16.gmra.mxu0 %v1270
    %v2349 = vpop.f32.mrf.mxu0
    %v2350 = vadd.f32 %v2336, %v2349
    %v2351 = vpop.f32.mrf.mxu0
    %v2352 = vadd.f32 %v2338, %v2351
    %2353 = vdwg.mxu0
    %2354 = vmatpush.bf16.msra.mxu0 %v2024
    %2355 = vmatpush.bf16.msra.mxu0 %v2021
    %2356 = vmatpush.bf16.msra.mxu0 %v2018
    %2357 = vmatpush.bf16.msra.mxu0 %v2015
    %2358 = vmatpush.bf16.msra.mxu0 %v2012
    %2359 = vmatpush.bf16.msra.mxu0 %v2009
    %2360 = vmatpush.bf16.msra.mxu0 %v2006
    %2361 = vmatpush.bf16.msra.mxu0 %v2003
    %2362 = vmatmul.bf16.gmra.mxu0 %v1271
    %v2363 = vpop.f32.mrf.mxu0
    %v2364 = vadd.f32 %v2350, %v2363
    %v2365 = vpop.f32.mrf.mxu0
    %v2366 = vadd.f32 %v2352, %v2365
    %2367 = vdwg.mxu0
    %2368 = vmatpush.bf16.msra.mxu0 %v2048
    %2369 = vmatpush.bf16.msra.mxu0 %v2045
    %2370 = vmatpush.bf16.msra.mxu0 %v2042
    %2371 = vmatpush.bf16.msra.mxu0 %v2039
    %2372 = vmatpush.bf16.msra.mxu0 %v2036
    %2373 = vmatpush.bf16.msra.mxu0 %v2033
    %2374 = vmatpush.bf16.msra.mxu0 %v2030
    %2375 = vmatpush.bf16.msra.mxu0 %v2027
    %2376 = vmatmul.bf16.gmra.mxu0 %v1272
    %v2377 = vpop.f32.mrf.mxu0
    %v2378 = vadd.f32 %v2364, %v2377
    %v2379 = vpop.f32.mrf.mxu0
    %v2380 = vadd.f32 %v2366, %v2379
    %2381 = vdwg.mxu0
    %2382 = vmatpush.bf16.msra.mxu0 %v2072
    %2383 = vmatpush.bf16.msra.mxu0 %v2069
    %2384 = vmatpush.bf16.msra.mxu0 %v2066
    %2385 = vmatpush.bf16.msra.mxu0 %v2063
    %2386 = vmatpush.bf16.msra.mxu0 %v2060
    %2387 = vmatpush.bf16.msra.mxu0 %v2057
    %2388 = vmatpush.bf16.msra.mxu0 %v2054
    %2389 = vmatpush.bf16.msra.mxu0 %v2051
    %2390 = vmatmul.bf16.gmra.mxu0 %v1273
    %v2391 = vpop.f32.mrf.mxu0
    %v2392 = vadd.f32 %v2378, %v2391
    %v2393 = vpop.f32.mrf.mxu0
    %v2394 = vadd.f32 %v2380, %v2393
    %2395 = vdwg.mxu0
    %2396 = vmatpush.bf16.msra.mxu0 %v2096
    %2397 = vmatpush.bf16.msra.mxu0 %v2093
    %2398 = vmatpush.bf16.msra.mxu0 %v2090
    %2399 = vmatpush.bf16.msra.mxu0 %v2087
    %2400 = vmatpush.bf16.msra.mxu0 %v2084
    %2401 = vmatpush.bf16.msra.mxu0 %v2081
    %2402 = vmatpush.bf16.msra.mxu0 %v2078
    %2403 = vmatpush.bf16.msra.mxu0 %v2075
    %2404 = vmatmul.bf16.gmra.mxu0 %v1274
    %v2405 = vpop.f32.mrf.mxu0
    %v2406 = vadd.f32 %v2392, %v2405
    %v2407 = vpop.f32.mrf.mxu0
    %v2408 = vadd.f32 %v2394, %v2407
    %2409 = vdwg.mxu0
    %2410 = vmatpush.bf16.msra.mxu0 %v1977
    %2411 = vmatpush.bf16.msra.mxu0 %v1974
    %2412 = vmatpush.bf16.msra.mxu0 %v1971
    %2413 = vmatpush.bf16.msra.mxu0 %v1968
    %2414 = vmatpush.bf16.msra.mxu0 %v1965
    %2415 = vmatpush.bf16.msra.mxu0 %v1962
    %2416 = vmatpush.bf16.msra.mxu0 %v1959
    %2417 = vmatpush.bf16.msra.mxu0 %v1956
    %2418 = vmatmul.bf16.gmra.mxu0 %v1269
    %v2419 = vpop.f32.mrf.mxu0
    %v2420 = vadd.f32 %v1470, %v2419
    %v2421 = vpop.f32.mrf.mxu0
    %v2422 = vadd.f32 %v1470, %v2421
    %2423 = vdwg.mxu0
    %2424 = vmatpush.bf16.msra.mxu0 %v2001
    %2425 = vmatpush.bf16.msra.mxu0 %v1998
    %2426 = vmatpush.bf16.msra.mxu0 %v1995
    %2427 = vmatpush.bf16.msra.mxu0 %v1992
    %2428 = vmatpush.bf16.msra.mxu0 %v1989
    %2429 = vmatpush.bf16.msra.mxu0 %v1986
    %2430 = vmatpush.bf16.msra.mxu0 %v1983
    %2431 = vmatpush.bf16.msra.mxu0 %v1980
    %2432 = vmatmul.bf16.gmra.mxu0 %v1270
    %v2433 = vpop.f32.mrf.mxu0
    %v2434 = vadd.f32 %v2420, %v2433
    %v2435 = vpop.f32.mrf.mxu0
    %v2436 = vadd.f32 %v2422, %v2435
    %2437 = vdwg.mxu0
    %2438 = vmatpush.bf16.msra.mxu0 %v2025
    %2439 = vmatpush.bf16.msra.mxu0 %v2022
    %2440 = vmatpush.bf16.msra.mxu0 %v2019
    %2441 = vmatpush.bf16.msra.mxu0 %v2016
    %2442 = vmatpush.bf16.msra.mxu0 %v2013
    %2443 = vmatpush.bf16.msra.mxu0 %v2010
    %2444 = vmatpush.bf16.msra.mxu0 %v2007
    %2445 = vmatpush.bf16.msra.mxu0 %v2004
    %2446 = vmatmul.bf16.gmra.mxu0 %v1271
    %v2447 = vpop.f32.mrf.mxu0
    %v2448 = vadd.f32 %v2434, %v2447
    %v2449 = vpop.f32.mrf.mxu0
    %v2450 = vadd.f32 %v2436, %v2449
    %2451 = vdwg.mxu0
    %2452 = vmatpush.bf16.msra.mxu0 %v2049
    %2453 = vmatpush.bf16.msra.mxu0 %v2046
    %2454 = vmatpush.bf16.msra.mxu0 %v2043
    %2455 = vmatpush.bf16.msra.mxu0 %v2040
    %2456 = vmatpush.bf16.msra.mxu0 %v2037
    %2457 = vmatpush.bf16.msra.mxu0 %v2034
    %2458 = vmatpush.bf16.msra.mxu0 %v2031
    %2459 = vmatpush.bf16.msra.mxu0 %v2028
    %2460 = vmatmul.bf16.gmra.mxu0 %v1272
    %v2461 = vpop.f32.mrf.mxu0
    %v2462 = vadd.f32 %v2448, %v2461
    %v2463 = vpop.f32.mrf.mxu0
    %v2464 = vadd.f32 %v2450, %v2463
    %2465 = vdwg.mxu0
    %2466 = vmatpush.bf16.msra.mxu0 %v2073
    %2467 = vmatpush.bf16.msra.mxu0 %v2070
    %2468 = vmatpush.bf16.msra.mxu0 %v2067
    %2469 = vmatpush.bf16.msra.mxu0 %v2064
    %2470 = vmatpush.bf16.msra.mxu0 %v2061
    %2471 = vmatpush.bf16.msra.mxu0 %v2058
    %2472 = vmatpush.bf16.msra.mxu0 %v2055
    %2473 = vmatpush.bf16.msra.mxu0 %v2052
    %2474 = vmatmul.bf16.gmra.mxu0 %v1273
    %v2475 = vpop.f32.mrf.mxu0
    %v2476 = vadd.f32 %v2462, %v2475
    %v2477 = vpop.f32.mrf.mxu0
    %v2478 = vadd.f32 %v2464, %v2477
    %2479 = vdwg.mxu0
    %2480 = vmatpush.bf16.msra.mxu0 %v2097
    %2481 = vmatpush.bf16.msra.mxu0 %v2094
    %2482 = vmatpush.bf16.msra.mxu0 %v2091
    %2483 = vmatpush.bf16.msra.mxu0 %v2088
    %2484 = vmatpush.bf16.msra.mxu0 %v2085
    %2485 = vmatpush.bf16.msra.mxu0 %v2082
    %2486 = vmatpush.bf16.msra.mxu0 %v2079
    %2487 = vmatpush.bf16.msra.mxu0 %v2076
    %2488 = vmatmul.bf16.gmra.mxu0 %v1274
    %v2489 = vpop.f32.mrf.mxu0
    %v2490 = vadd.f32 %v2476, %v2489
    %v2491 = vpop.f32.mrf.mxu0
    %v2492 = vadd.f32 %v2478, %v2491
    %2493 = vdwg.mxu0
    %v2494 = vadd.f32 %v2322, %v2406
    %v2495 = vadd.f32 %v2494, %v2490
    %2496 = vadd.xlane.f32.xlu0 %v2495
    %v2497 = vpop.xlane.xlu0 %2496
    %v2498 = vadd.f32 %v2324, %v2408
    %v2499 = vadd.f32 %v2498, %v2492
    %2500 = vadd.xlane.f32.xlu0 %v2499
    %v2501 = vpop.xlane.xlu0 %2500
    %v2502 = vmul.f32 %v2497, 0.0026041667
    %v2503 = vmul.f32 %v2501, 0.0026041667
    %v2504 = vsub.f32 %v2322, %v2502
    %v2505 = vsub.f32 %v2406, %v2502
    %v2506 = vsub.f32 %v2490, %v2502
    %v2507 = vsub.f32 %v2324, %v2503
    %v2508 = vsub.f32 %v2408, %v2503
    %v2509 = vsub.f32 %v2492, %v2503
    %v2510 = vmul.f32 %v2504, %v2504
    %v2511 = vmul.f32 %v2505, %v2505
    %v2512 = vmul.f32 %v2506, %v2506
    %v2513 = vmul.f32 %v2507, %v2507
    %v2514 = vmul.f32 %v2508, %v2508
    %v2515 = vmul.f32 %v2509, %v2509
    %v2516 = vadd.f32 %v2510, %v2511
    %v2517 = vadd.f32 %v2516, %v2512
    %2518 = vadd.xlane.f32.xlu0 %v2517
    %v2519 = vpop.xlane.xlu0 %2518
    %v2520 = vadd.f32 %v2513, %v2514
    %v2521 = vadd.f32 %v2520, %v2515
    %2522 = vadd.xlane.f32.xlu0 %v2521
    %v2523 = vpop.xlane.xlu0 %2522
    %v2524 = vmul.f32 %v2519, 0.0026041667
    %v2525 = vmul.f32 %v2523, 0.0026041667
    %v2526 = vadd.f32 %v2524, 1e-05
    %v2527 = vadd.f32 %v2525, 1e-05
    %v2528 = vrsqrt.pop %v2526
    %v2529 = vmul.f32 %v2528, %v2526
    %v2530 = vmul.f32 %v2529, %v2528
    %v2531 = vmul.f32 0.5, %v2530
    %v2532 = vsub.f32 1.5, %v2531
    %v2533 = vmul.f32 %v2528, %v2532
    %vm2534 = vweird.f32 %v2526
    %vm2535 = vweird.f32 %v2528
    %vm2536 = vmor %vm2534, %vm2535
    %v2537 = vsel %vm2536, %v2528, %v2533
    %v2538 = vrsqrt.pop %v2527
    %v2539 = vmul.f32 %v2538, %v2527
    %v2540 = vmul.f32 %v2539, %v2538
    %v2541 = vmul.f32 0.5, %v2540
    %v2542 = vsub.f32 1.5, %v2541
    %v2543 = vmul.f32 %v2538, %v2542
    %vm2544 = vweird.f32 %v2527
    %vm2545 = vweird.f32 %v2538
    %vm2546 = vmor %vm2544, %vm2545
    %v2547 = vsel %vm2546, %v2538, %v2543
    %v2548 = vmul.f32 %v2504, %v2537
    %v2549 = vmul.f32 %v2505, %v2537
    %v2550 = vmul.f32 %v2506, %v2537
    %v2551 = vmul.f32 %v2507, %v2547
    %v2552 = vmul.f32 %v2508, %v2547
    %v2553 = vmul.f32 %v2509, %v2547
    %v2555 = vperm.slane %v117, 0
    %v2556 = vperm.slane %v117, 1
    %v2557 = vperm.slane %v117, 2
    %v2561 = vmul.f32 %v2548, %v2555
    %v2562 = vmul.f32 %v2549, %v2556
    %v2563 = vmul.f32 %v2550, %v2557
    %v2564 = vmul.f32 %v2551, %v2555
    %v2565 = vmul.f32 %v2552, %v2556
    %v2566 = vmul.f32 %v2553, %v2557
    %v2568 = vperm.slane %v118, 0
    %v2569 = vperm.slane %v118, 1
    %v2570 = vperm.slane %v118, 2
    %v2574 = vadd.f32 %v2561, %v2568
    %v2575 = vadd.f32 %v2562, %v2569
    %v2576 = vadd.f32 %v2563, %v2570
    %v2577 = vadd.f32 %v2564, %v2568
    %v2578 = vadd.f32 %v2565, %v2569
    %v2579 = vadd.f32 %v2566, %v2570
    %2580 = vst [vmem:[#allocation13] sm:$0xff] %v2574
    %2581 = vst [vmem:[#allocation13 + $0x8] sm:$0xff] %v2575
    %2582 = vst [vmem:[#allocation13 + $0x10] sm:$0xff] %v2576
    %2583 = vst [vmem:[#allocation13 + $0x18] sm:$0xff] %v2577
    %2584 = vst [vmem:[#allocation13 + $0x20] sm:$0xff] %v2578
    %2585 = vst [vmem:[#allocation13 + $0x28] sm:$0xff] %v2579
    // Predicated region
    $region54: #{tpu_custom_call.1} parent=1 // pred_check
      _
    $region55: #{tpu_custom_call.1} parent=1 // pred_check_branch
      %2587 = sbr.rel (0) target = $region57
    $region56: #{tpu_custom_call.1} parent=1 // pred_region
      %2589 = vsyncadd [#allocation4], 0
      %s2590 = sshll.u32 [#allocation13], 4
      %s2591 = int_to_ptr.vmem [resolvable:$true] %s2590
      %s2592 = sshll.u32 %s7, 4
      %s2593 = int_to_ptr.hbm [resolvable:$true] %s2592
      %2598 = dma.vmem_to_hbm [thread:$0]  %s2591, 768, %s2593, [#allocation4], 384, 384, 24
    $region57: #{tpu_custom_call.1} parent=1 // pred_fallthru
      _
    // Predicated region
    $region58: #{tpu_custom_call.1} parent=1 // pred_check
      _
    $region59: #{tpu_custom_call.1} parent=1 // pred_check_branch
      %2600 = sbr.rel (0) target = $region61
    $region60: #{tpu_custom_call.1} parent=1 // pred_region
      %2602 = dma.done [#allocation4], 768
    $region61: #{tpu_custom_call.1} parent=1 // pred_fallthru
      _
    %2603 = vsyncpa [#allocation3], 1
    %2604 = vsyncpa [#allocation6], 1
    %2605 = vsyncpa [#allocation9], 1
    %2606 = vsyncpa [#allocation12], 1
    %2607 = vsyncpa [#allocation4], 1

</llo_original>
